<compile_context>
chip_gen: v7x
topology: tpu7x:2x2x1
jax: 0.10.0
libtpu: 0.0.40
codegen_flags: <defaults>
</compile_context>

<pallas_src>
import functools
import math

import jax
import jax.numpy as jnp
from jax import lax
from jax.experimental import pallas as pl
from jax.experimental.pallas import tpu as pltpu


def _round_up(x, m):
    return ((x + m - 1) // m) * m


def _num_tensorcores():
    """Best-effort TensorCores-per-chip probe (v7x = 2, v5e/v6e = 1)."""
    try:
        dev = jax.devices()[0]
        for attr in ("num_cores", "core_count"):
            val = getattr(dev, attr, None)
            if isinstance(val, int) and val > 0:
                return val
    except Exception:
        pass
    return 1


def _text_embed_kernel(dev_ids_ref, res_ids_ref, g_ref, b_ref, o_ref, acc_ref,
                       *, tile_v):
    """Grid = (n tiles, vocab tiles); vocab axis is an accumulated reduction."""
    j = pl.program_id(1)

    @pl.when(j == 0)
    def _():
        acc_ref[...] = jnp.zeros_like(acc_ref)

    tn = o_ref.shape[1]
    base = j * tile_v
    # vocab ids covered by this tile, broadcast over the lane (N) axis
    v_iota = lax.broadcasted_iota(jnp.int32, (tile_v, tn), 0) + base

    def counts(ids):
        # ids: (L, TN) int32; masked tokens are already the -1 sentinel.
        #   counts[v, n] = #{ l : ids[l, n] == base + v }
        cnt = jnp.zeros((tile_v, tn), jnp.int32)
        for l in range(ids.shape[0]):          # static unroll; L is small
            cnt = cnt + (ids[l, :][None, :] == v_iota).astype(jnp.int32)
        return cnt

    dev_cnt = counts(dev_ids_ref[...])
    res_cnt = counts(res_ids_ref[...])
    # one (2*tile_v, TN) slab -> single fused MXU dot; bf16 exact (counts <= L)
    cnt = jnp.concatenate([dev_cnt, res_cnt], axis=0).astype(jnp.bfloat16)

    acc_ref[...] += jnp.dot(g_ref[...], cnt, preferred_element_type=jnp.float32)

    @pl.when(j == pl.num_programs(1) - 1)
    def _():
        o_ref[...] = jnp.tanh(acc_ref[...] + b_ref[...]).astype(o_ref.dtype)


def text_embedding_forward(dev_ids, res_ids, emb_table, proj_w, proj_b,
                           *, tile_n=512, tile_v=256):
    """dev_ids/res_ids: (..., L) int token ids; emb_table: (V, H);
    proj_w: (H, 2H) torch Linear weight; proj_b: (H,).  Returns (..., H)."""
    lead = dev_ids.shape[:-1]
    assert res_ids.shape[:-1] == lead
    v_sz, h = emb_table.shape
    assert proj_w.shape == (h, 2 * h) and proj_b.shape == (h,)

    l_dev = dev_ids.shape[-1]
    l_res = res_ids.shape[-1]
    assert max(l_dev, l_res) <= 256, "bf16 counts only exact for <= 256 tokens"
    n = max(1, math.prod(lead))

    # ---- id preprocessing: fold the (id >= 4) mask into a -1 sentinel so the
    # kernel inner loop is a single compare + add per element.
    # NOTE: ids outside [0, V) are silently dropped (torch would error).
    def prep(ids, l):
        ids = ids.reshape(n, l).astype(jnp.int32)
        ids = jnp.where(ids >= 4, ids, -1)
        return ids.T                                            # (L, N)

    dev_t = prep(dev_ids, l_dev)
    res_t = prep(res_ids, l_res)

    # ---- N (lane) tiling: lane-dense multiples of 128; only shrink for >= 2
    # grid steps when the chip actually has 2 TensorCores.
    tile_n = _round_up(max(128, min(tile_n, _round_up(n, 128))), 128)
    if _num_tensorcores() >= 2:
        while tile_n > 128 and -(-n // tile_n) < 2:
            tile_n -= 128
    n_pad = _round_up(n, tile_n)
    if n_pad != n:
        dev_t = jnp.pad(dev_t, ((0, 0), (0, n_pad - n)), constant_values=-1)
        res_t = jnp.pad(res_t, ((0, 0), (0, n_pad - n)), constant_values=-1)
    n_tiles = n_pad // tile_n

    # ---- vocab (contraction) tiling: tile_v multiple of 64 so the fused
    # contraction 2*tile_v is a multiple of 128 (256 when tile_v >= 128).
    tile_v = max(64, min(_round_up(tile_v, 64), _round_up(v_sz, 64)))
    v_pad = _round_up(v_sz, tile_v)
    v_tiles = v_pad // tile_v

    # ---- fold the projection into the table: Ga/Gb interleaved per vocab tile
    # so one (H, 2*tile_v) bf16 block pairs with the [dev ; res] counts slab.
    emb_pad = jnp.pad(emb_table.astype(jnp.float32),
                      ((0, v_pad - v_sz), (0, 0)))               # (Vp, H)
    wa = proj_w[:, :h].astype(jnp.float32)                       # (H, H)
    wb = proj_w[:, h:].astype(jnp.float32)                       # (H, H)
    ga = (wa @ emb_pad.T).reshape(h, v_tiles, tile_v)
    gb = (wb @ emb_pad.T).reshape(h, v_tiles, tile_v)
    g = jnp.concatenate([ga, gb], axis=2).reshape(h, v_tiles * 2 * tile_v)
    g = g.astype(jnp.bfloat16)                                   # bf16 MXU path
    b2 = proj_b.reshape(h, 1).astype(jnp.float32)

    # ---- VMEM budget (double-buffered blocks + in-kernel temps) with headroom
    est = (2 * 2 * (l_dev + l_res) * tile_n * 4       # id blocks (x2 buf)
           + 2 * h * 2 * tile_v * 2                   # G blocks (bf16, x2 buf)
           + 3 * h * tile_n * 4                       # out blocks + accumulator
           + 4 * 2 * tile_v * tile_n * 4)             # counts / iota temps
    vmem_limit = int(min(max(32 << 20, 2 * est), 64 << 20))

    flops = 4 * h * v_pad * n_pad                     # the single fused dot
    bytes_acc = (4 * ((l_dev + l_res) * n_pad + h * n_pad + h)
                 + 2 * h * 2 * v_pad * n_tiles)

    kernel = functools.partial(_text_embed_kernel, tile_v=tile_v)

    out_t = pl.pallas_call(
        kernel,
        out_shape=jax.ShapeDtypeStruct((h, n_pad), emb_table.dtype),
        grid_spec=pltpu.PrefetchScalarGridSpec(
            num_scalar_prefetch=0,
            grid=(n_tiles, v_tiles),
            in_specs=[
                pl.BlockSpec((l_dev, tile_n), lambda i, j: (0, i)),   # dev ids^T
                pl.BlockSpec((l_res, tile_n), lambda i, j: (0, i)),   # res ids^T
                pl.BlockSpec((h, 2 * tile_v), lambda i, j: (0, j)),   # fused G
                pl.BlockSpec((h, 1), lambda i, j: (0, 0)),            # bias
            ],
            out_specs=pl.BlockSpec((h, tile_n), lambda i, j: (0, i)),
            scratch_shapes=[pltpu.VMEM((h, tile_n), jnp.float32)],
        ),
        compiler_params=pltpu.CompilerParams(
            dimension_semantics=("parallel", "arbitrary"),
            vmem_limit_bytes=vmem_limit),
        cost_estimate=pl.CostEstimate(
            flops=flops, transcendentals=n_pad * h, bytes_accessed=bytes_acc),
    )(dev_t, res_t, g, b2)

    # undo the layout transpose / padding (plumbing only, not compute)
    return out_t[:, :n].T.reshape(lead + (h,))


def reference_forward(dev_ids, res_ids, emb_table, proj_w, proj_b):
    """Plain-JAX (f32) reference mirroring the PyTorch module."""
    def agg(ids):
        emb = emb_table[ids]                                      # (..., L, H)
        mask = (ids >= 4).astype(emb_table.dtype)[..., None]
        return jnp.sum(emb * mask, axis=-2)

    cat = jnp.concatenate([agg(dev_ids), agg(res_ids)], axis=-1)
    return jnp.tanh(cat @ proj_w.T + proj_b)


if __name__ == "__main__":
    # small config: batch=2, objects=8 (N=16 rows), 16 tokens per field,
    # vocab=64, hidden_size=32  (projection is Linear(2*32, 32))
    B, O, L = 2, 8, 16
    V, H = 64, 32

    key = jax.random.PRNGKey(0)
    k_dev, k_res, k_emb, k_w, k_b = jax.random.split(key, 5)

    dev_ids = jax.random.randint(k_dev, (B, O, L), 0, V, dtype=jnp.int32)
    res_ids = jax.random.randint(k_res, (B, O, L), 0, V, dtype=jnp.int32)
    emb_table = jax.random.normal(k_emb, (V, H), jnp.float32) * 0.02
    lim = 1.0 / math.sqrt(2 * H)
    proj_w = jax.random.uniform(k_w, (H, 2 * H), jnp.float32, -lim, lim)
    proj_b = jax.random.uniform(k_b, (H,), jnp.float32, -lim, lim)

    out = text_embedding_forward(dev_ids, res_ids, emb_table, proj_w, proj_b,
                                 tile_n=512, tile_v=256)
    out = jax.block_until_ready(out)

    ref = reference_forward(dev_ids, res_ids, emb_table, proj_w, proj_b)
    assert out.shape == (B, O, H), out.shape
    # bf16 MXU path: tolerance reflects bf16 rounding of the fused table/weights
    assert jnp.allclose(out, ref, atol=1e-2, rtol=1e-2), (
        "mismatch vs reference, max abs err = "
        f"{float(jnp.max(jnp.abs(out - ref)))}")

    print("KERNEL_OK")
</pallas_src>

<mosaic_0001>
module attributes {stable_mosaic.version = 11 : i64} {
  func.func @_text_embed_kernel(%arg0: i32, %arg1: i32, %arg2: memref<16x128xi32, #tpu.memory_space<vmem>>, %arg3: memref<16x128xi32, #tpu.memory_space<vmem>>, %arg4: memref<32x128xbf16, #tpu.memory_space<vmem>>, %arg5: memref<32x1xf32, #tpu.memory_space<vmem>>, %arg6: memref<32x128xf32, #tpu.memory_space<vmem>>, %arg7: memref<32x128xf32, #tpu.memory_space<vmem>>) attributes {dimension_semantics = [#tpu.dimension_semantics<parallel>, #tpu.dimension_semantics<arbitrary>], iteration_bounds = array<i64: 1, 1>, scalar_prefetch = 0 : i64, scratch_operands = 1 : i64, tpu.core_type = #tpu.core_type<tc>, window_params = [{transform_indices = @transform_0, window_bounds = array<i64: 16, 128>}, {transform_indices = @transform_1, window_bounds = array<i64: 16, 128>}, {transform_indices = @transform_2, window_bounds = array<i64: 32, 128>}, {pipeline_mode = #tpu.pipeline_mode<synchronous>, transform_indices = @transform_3, window_bounds = array<i64: 32, 1>}, {transform_indices = @transform_4, window_bounds = array<i64: 32, 128>}]} {
    %c0_i32 = arith.constant 0 : i32
    %0 = arith.cmpi eq, %arg1, %c0_i32 : i32
    %1 = arith.extui %0 : i1 to i32
    %c0_i32_0 = arith.constant 0 : i32
    %2 = arith.cmpi ne, %1, %c0_i32_0 : i32
    scf.if %2 {
      %cst_14 = arith.constant 0.000000e+00 : f32
      %245 = vector.broadcast %cst_14 : f32 to vector<32x128xf32>
      %c0_15 = arith.constant 0 : index
      %c0_16 = arith.constant 0 : index
      %246 = vector.load %arg7[%c0_15, %c0_16] : memref<32x128xf32, #tpu.memory_space<vmem>>, vector<32x128xf32>
      tpu.vector_store %arg7[%c0_15, %c0_16], %245 {strides = array<i32>} : memref<32x128xf32, #tpu.memory_space<vmem>>, vector<32x128xf32>,
    } else {
    }
    %c64_i32 = arith.constant 64 : i32
    %3 = arith.muli %arg1, %c64_i32 : i32
    %4 = tpu.iota {dimensions = array<i32: 0>} : vector<64x128xi32>
    %5 = vector.broadcast %3 : i32 to vector<64x128xi32>
    %6 = arith.addi %4, %5 : vector<64x128xi32>
    %c0 = arith.constant 0 : index
    %c0_1 = arith.constant 0 : index
    %7 = vector.load %arg2[%c0, %c0_1] : memref<16x128xi32, #tpu.memory_space<vmem>>, vector<16x128xi32>
    %c0_i32_2 = arith.constant 0 : i32
    %8 = vector.broadcast %c0_i32_2 : i32 to vector<64x128xi32>
    %9 = vector.extract_strided_slice %7 {offsets = [0, 0], sizes = [1, 128], strides = [1, 1]} : vector<16x128xi32> to vector<1x128xi32>
    %10 = vector.shape_cast %9 : vector<1x128xi32> to vector<128xi32>
    %11 = vector.shape_cast %10 : vector<128xi32> to vector<1x128xi32>
    %12 = vector.broadcast %11 : vector<1x128xi32> to vector<64x128xi32>
    %13 = arith.cmpi eq, %12, %6 : vector<64x128xi32>
    %14 = arith.extui %13 : vector<64x128xi1> to vector<64x128xi32>
    %15 = arith.addi %8, %14 : vector<64x128xi32>
    %16 = vector.extract_strided_slice %7 {offsets = [1, 0], sizes = [1, 128], strides = [1, 1]} : vector<16x128xi32> to vector<1x128xi32>
    %17 = vector.shape_cast %16 : vector<1x128xi32> to vector<128xi32>
    %18 = vector.shape_cast %17 : vector<128xi32> to vector<1x128xi32>
    %19 = vector.broadcast %18 : vector<1x128xi32> to vector<64x128xi32>
    %20 = arith.cmpi eq, %19, %6 : vector<64x128xi32>
    %21 = arith.extui %20 : vector<64x128xi1> to vector<64x128xi32>
    %22 = arith.addi %15, %21 : vector<64x128xi32>
    %23 = vector.extract_strided_slice %7 {offsets = [2, 0], sizes = [1, 128], strides = [1, 1]} : vector<16x128xi32> to vector<1x128xi32>
    %24 = vector.shape_cast %23 : vector<1x128xi32> to vector<128xi32>
    %25 = vector.shape_cast %24 : vector<128xi32> to vector<1x128xi32>
    %26 = vector.broadcast %25 : vector<1x128xi32> to vector<64x128xi32>
    %27 = arith.cmpi eq, %26, %6 : vector<64x128xi32>
    %28 = arith.extui %27 : vector<64x128xi1> to vector<64x128xi32>
    %29 = arith.addi %22, %28 : vector<64x128xi32>
    %30 = vector.extract_strided_slice %7 {offsets = [3, 0], sizes = [1, 128], strides = [1, 1]} : vector<16x128xi32> to vector<1x128xi32>
    %31 = vector.shape_cast %30 : vector<1x128xi32> to vector<128xi32>
    %32 = vector.shape_cast %31 : vector<128xi32> to vector<1x128xi32>
    %33 = vector.broadcast %32 : vector<1x128xi32> to vector<64x128xi32>
    %34 = arith.cmpi eq, %33, %6 : vector<64x128xi32>
    %35 = arith.extui %34 : vector<64x128xi1> to vector<64x128xi32>
    %36 = arith.addi %29, %35 : vector<64x128xi32>
    %37 = vector.extract_strided_slice %7 {offsets = [4, 0], sizes = [1, 128], strides = [1, 1]} : vector<16x128xi32> to vector<1x128xi32>
    %38 = vector.shape_cast %37 : vector<1x128xi32> to vector<128xi32>
    %39 = vector.shape_cast %38 : vector<128xi32> to vector<1x128xi32>
    %40 = vector.broadcast %39 : vector<1x128xi32> to vector<64x128xi32>
    %41 = arith.cmpi eq, %40, %6 : vector<64x128xi32>
    %42 = arith.extui %41 : vector<64x128xi1> to vector<64x128xi32>
    %43 = arith.addi %36, %42 : vector<64x128xi32>
    %44 = vector.extract_strided_slice %7 {offsets = [5, 0], sizes = [1, 128], strides = [1, 1]} : vector<16x128xi32> to vector<1x128xi32>
    %45 = vector.shape_cast %44 : vector<1x128xi32> to vector<128xi32>
    %46 = vector.shape_cast %45 : vector<128xi32> to vector<1x128xi32>
    %47 = vector.broadcast %46 : vector<1x128xi32> to vector<64x128xi32>
    %48 = arith.cmpi eq, %47, %6 : vector<64x128xi32>
    %49 = arith.extui %48 : vector<64x128xi1> to vector<64x128xi32>
    %50 = arith.addi %43, %49 : vector<64x128xi32>
    %51 = vector.extract_strided_slice %7 {offsets = [6, 0], sizes = [1, 128], strides = [1, 1]} : vector<16x128xi32> to vector<1x128xi32>
    %52 = vector.shape_cast %51 : vector<1x128xi32> to vector<128xi32>
    %53 = vector.shape_cast %52 : vector<128xi32> to vector<1x128xi32>
    %54 = vector.broadcast %53 : vector<1x128xi32> to vector<64x128xi32>
    %55 = arith.cmpi eq, %54, %6 : vector<64x128xi32>
    %56 = arith.extui %55 : vector<64x128xi1> to vector<64x128xi32>
    %57 = arith.addi %50, %56 : vector<64x128xi32>
    %58 = vector.extract_strided_slice %7 {offsets = [7, 0], sizes = [1, 128], strides = [1, 1]} : vector<16x128xi32> to vector<1x128xi32>
    %59 = vector.shape_cast %58 : vector<1x128xi32> to vector<128xi32>
    %60 = vector.shape_cast %59 : vector<128xi32> to vector<1x128xi32>
    %61 = vector.broadcast %60 : vector<1x128xi32> to vector<64x128xi32>
    %62 = arith.cmpi eq, %61, %6 : vector<64x128xi32>
    %63 = arith.extui %62 : vector<64x128xi1> to vector<64x128xi32>
    %64 = arith.addi %57, %63 : vector<64x128xi32>
    %65 = vector.extract_strided_slice %7 {offsets = [8, 0], sizes = [1, 128], strides = [1, 1]} : vector<16x128xi32> to vector<1x128xi32>
    %66 = vector.shape_cast %65 : vector<1x128xi32> to vector<128xi32>
    %67 = vector.shape_cast %66 : vector<128xi32> to vector<1x128xi32>
    %68 = vector.broadcast %67 : vector<1x128xi32> to vector<64x128xi32>
    %69 = arith.cmpi eq, %68, %6 : vector<64x128xi32>
    %70 = arith.extui %69 : vector<64x128xi1> to vector<64x128xi32>
    %71 = arith.addi %64, %70 : vector<64x128xi32>
    %72 = vector.extract_strided_slice %7 {offsets = [9, 0], sizes = [1, 128], strides = [1, 1]} : vector<16x128xi32> to vector<1x128xi32>
    %73 = vector.shape_cast %72 : vector<1x128xi32> to vector<128xi32>
    %74 = vector.shape_cast %73 : vector<128xi32> to vector<1x128xi32>
    %75 = vector.broadcast %74 : vector<1x128xi32> to vector<64x128xi32>
    %76 = arith.cmpi eq, %75, %6 : vector<64x128xi32>
    %77 = arith.extui %76 : vector<64x128xi1> to vector<64x128xi32>
    %78 = arith.addi %71, %77 : vector<64x128xi32>
    %79 = vector.extract_strided_slice %7 {offsets = [10, 0], sizes = [1, 128], strides = [1, 1]} : vector<16x128xi32> to vector<1x128xi32>
    %80 = vector.shape_cast %79 : vector<1x128xi32> to vector<128xi32>
    %81 = vector.shape_cast %80 : vector<128xi32> to vector<1x128xi32>
    %82 = vector.broadcast %81 : vector<1x128xi32> to vector<64x128xi32>
    %83 = arith.cmpi eq, %82, %6 : vector<64x128xi32>
    %84 = arith.extui %83 : vector<64x128xi1> to vector<64x128xi32>
    %85 = arith.addi %78, %84 : vector<64x128xi32>
    %86 = vector.extract_strided_slice %7 {offsets = [11, 0], sizes = [1, 128], strides = [1, 1]} : vector<16x128xi32> to vector<1x128xi32>
    %87 = vector.shape_cast %86 : vector<1x128xi32> to vector<128xi32>
    %88 = vector.shape_cast %87 : vector<128xi32> to vector<1x128xi32>
    %89 = vector.broadcast %88 : vector<1x128xi32> to vector<64x128xi32>
    %90 = arith.cmpi eq, %89, %6 : vector<64x128xi32>
    %91 = arith.extui %90 : vector<64x128xi1> to vector<64x128xi32>
    %92 = arith.addi %85, %91 : vector<64x128xi32>
    %93 = vector.extract_strided_slice %7 {offsets = [12, 0], sizes = [1, 128], strides = [1, 1]} : vector<16x128xi32> to vector<1x128xi32>
    %94 = vector.shape_cast %93 : vector<1x128xi32> to vector<128xi32>
    %95 = vector.shape_cast %94 : vector<128xi32> to vector<1x128xi32>
    %96 = vector.broadcast %95 : vector<1x128xi32> to vector<64x128xi32>
    %97 = arith.cmpi eq, %96, %6 : vector<64x128xi32>
    %98 = arith.extui %97 : vector<64x128xi1> to vector<64x128xi32>
    %99 = arith.addi %92, %98 : vector<64x128xi32>
    %100 = vector.extract_strided_slice %7 {offsets = [13, 0], sizes = [1, 128], strides = [1, 1]} : vector<16x128xi32> to vector<1x128xi32>
    %101 = vector.shape_cast %100 : vector<1x128xi32> to vector<128xi32>
    %102 = vector.shape_cast %101 : vector<128xi32> to vector<1x128xi32>
    %103 = vector.broadcast %102 : vector<1x128xi32> to vector<64x128xi32>
    %104 = arith.cmpi eq, %103, %6 : vector<64x128xi32>
    %105 = arith.extui %104 : vector<64x128xi1> to vector<64x128xi32>
    %106 = arith.addi %99, %105 : vector<64x128xi32>
    %107 = vector.extract_strided_slice %7 {offsets = [14, 0], sizes = [1, 128], strides = [1, 1]} : vector<16x128xi32> to vector<1x128xi32>
    %108 = vector.shape_cast %107 : vector<1x128xi32> to vector<128xi32>
    %109 = vector.shape_cast %108 : vector<128xi32> to vector<1x128xi32>
    %110 = vector.broadcast %109 : vector<1x128xi32> to vector<64x128xi32>
    %111 = arith.cmpi eq, %110, %6 : vector<64x128xi32>
    %112 = arith.extui %111 : vector<64x128xi1> to vector<64x128xi32>
    %113 = arith.addi %106, %112 : vector<64x128xi32>
    %114 = vector.extract_strided_slice %7 {offsets = [15, 0], sizes = [1, 128], strides = [1, 1]} : vector<16x128xi32> to vector<1x128xi32>
    %115 = vector.shape_cast %114 : vector<1x128xi32> to vector<128xi32>
    %116 = vector.shape_cast %115 : vector<128xi32> to vector<1x128xi32>
    %117 = vector.broadcast %116 : vector<1x128xi32> to vector<64x128xi32>
    %118 = arith.cmpi eq, %117, %6 : vector<64x128xi32>
    %119 = arith.extui %118 : vector<64x128xi1> to vector<64x128xi32>
    %120 = arith.addi %113, %119 : vector<64x128xi32>
    %c0_3 = arith.constant 0 : index
    %c0_4 = arith.constant 0 : index
    %121 = vector.load %arg3[%c0_3, %c0_4] : memref<16x128xi32, #tpu.memory_space<vmem>>, vector<16x128xi32>
    %c0_i32_5 = arith.constant 0 : i32
    %122 = vector.broadcast %c0_i32_5 : i32 to vector<64x128xi32>
    %123 = vector.extract_strided_slice %121 {offsets = [0, 0], sizes = [1, 128], strides = [1, 1]} : vector<16x128xi32> to vector<1x128xi32>
    %124 = vector.shape_cast %123 : vector<1x128xi32> to vector<128xi32>
    %125 = vector.shape_cast %124 : vector<128xi32> to vector<1x128xi32>
    %126 = vector.broadcast %125 : vector<1x128xi32> to vector<64x128xi32>
    %127 = arith.cmpi eq, %126, %6 : vector<64x128xi32>
    %128 = arith.extui %127 : vector<64x128xi1> to vector<64x128xi32>
    %129 = arith.addi %122, %128 : vector<64x128xi32>
    %130 = vector.extract_strided_slice %121 {offsets = [1, 0], sizes = [1, 128], strides = [1, 1]} : vector<16x128xi32> to vector<1x128xi32>
    %131 = vector.shape_cast %130 : vector<1x128xi32> to vector<128xi32>
    %132 = vector.shape_cast %131 : vector<128xi32> to vector<1x128xi32>
    %133 = vector.broadcast %132 : vector<1x128xi32> to vector<64x128xi32>
    %134 = arith.cmpi eq, %133, %6 : vector<64x128xi32>
    %135 = arith.extui %134 : vector<64x128xi1> to vector<64x128xi32>
    %136 = arith.addi %129, %135 : vector<64x128xi32>
    %137 = vector.extract_strided_slice %121 {offsets = [2, 0], sizes = [1, 128], strides = [1, 1]} : vector<16x128xi32> to vector<1x128xi32>
    %138 = vector.shape_cast %137 : vector<1x128xi32> to vector<128xi32>
    %139 = vector.shape_cast %138 : vector<128xi32> to vector<1x128xi32>
    %140 = vector.broadcast %139 : vector<1x128xi32> to vector<64x128xi32>
    %141 = arith.cmpi eq, %140, %6 : vector<64x128xi32>
    %142 = arith.extui %141 : vector<64x128xi1> to vector<64x128xi32>
    %143 = arith.addi %136, %142 : vector<64x128xi32>
    %144 = vector.extract_strided_slice %121 {offsets = [3, 0], sizes = [1, 128], strides = [1, 1]} : vector<16x128xi32> to vector<1x128xi32>
    %145 = vector.shape_cast %144 : vector<1x128xi32> to vector<128xi32>
    %146 = vector.shape_cast %145 : vector<128xi32> to vector<1x128xi32>
    %147 = vector.broadcast %146 : vector<1x128xi32> to vector<64x128xi32>
    %148 = arith.cmpi eq, %147, %6 : vector<64x128xi32>
    %149 = arith.extui %148 : vector<64x128xi1> to vector<64x128xi32>
    %150 = arith.addi %143, %149 : vector<64x128xi32>
    %151 = vector.extract_strided_slice %121 {offsets = [4, 0], sizes = [1, 128], strides = [1, 1]} : vector<16x128xi32> to vector<1x128xi32>
    %152 = vector.shape_cast %151 : vector<1x128xi32> to vector<128xi32>
    %153 = vector.shape_cast %152 : vector<128xi32> to vector<1x128xi32>
    %154 = vector.broadcast %153 : vector<1x128xi32> to vector<64x128xi32>
    %155 = arith.cmpi eq, %154, %6 : vector<64x128xi32>
    %156 = arith.extui %155 : vector<64x128xi1> to vector<64x128xi32>
    %157 = arith.addi %150, %156 : vector<64x128xi32>
    %158 = vector.extract_strided_slice %121 {offsets = [5, 0], sizes = [1, 128], strides = [1, 1]} : vector<16x128xi32> to vector<1x128xi32>
    %159 = vector.shape_cast %158 : vector<1x128xi32> to vector<128xi32>
    %160 = vector.shape_cast %159 : vector<128xi32> to vector<1x128xi32>
    %161 = vector.broadcast %160 : vector<1x128xi32> to vector<64x128xi32>
    %162 = arith.cmpi eq, %161, %6 : vector<64x128xi32>
    %163 = arith.extui %162 : vector<64x128xi1> to vector<64x128xi32>
    %164 = arith.addi %157, %163 : vector<64x128xi32>
    %165 = vector.extract_strided_slice %121 {offsets = [6, 0], sizes = [1, 128], strides = [1, 1]} : vector<16x128xi32> to vector<1x128xi32>
    %166 = vector.shape_cast %165 : vector<1x128xi32> to vector<128xi32>
    %167 = vector.shape_cast %166 : vector<128xi32> to vector<1x128xi32>
    %168 = vector.broadcast %167 : vector<1x128xi32> to vector<64x128xi32>
    %169 = arith.cmpi eq, %168, %6 : vector<64x128xi32>
    %170 = arith.extui %169 : vector<64x128xi1> to vector<64x128xi32>
    %171 = arith.addi %164, %170 : vector<64x128xi32>
    %172 = vector.extract_strided_slice %121 {offsets = [7, 0], sizes = [1, 128], strides = [1, 1]} : vector<16x128xi32> to vector<1x128xi32>
    %173 = vector.shape_cast %172 : vector<1x128xi32> to vector<128xi32>
    %174 = vector.shape_cast %173 : vector<128xi32> to vector<1x128xi32>
    %175 = vector.broadcast %174 : vector<1x128xi32> to vector<64x128xi32>
    %176 = arith.cmpi eq, %175, %6 : vector<64x128xi32>
    %177 = arith.extui %176 : vector<64x128xi1> to vector<64x128xi32>
    %178 = arith.addi %171, %177 : vector<64x128xi32>
    %179 = vector.extract_strided_slice %121 {offsets = [8, 0], sizes = [1, 128], strides = [1, 1]} : vector<16x128xi32> to vector<1x128xi32>
    %180 = vector.shape_cast %179 : vector<1x128xi32> to vector<128xi32>
    %181 = vector.shape_cast %180 : vector<128xi32> to vector<1x128xi32>
    %182 = vector.broadcast %181 : vector<1x128xi32> to vector<64x128xi32>
    %183 = arith.cmpi eq, %182, %6 : vector<64x128xi32>
    %184 = arith.extui %183 : vector<64x128xi1> to vector<64x128xi32>
    %185 = arith.addi %178, %184 : vector<64x128xi32>
    %186 = vector.extract_strided_slice %121 {offsets = [9, 0], sizes = [1, 128], strides = [1, 1]} : vector<16x128xi32> to vector<1x128xi32>
    %187 = vector.shape_cast %186 : vector<1x128xi32> to vector<128xi32>
    %188 = vector.shape_cast %187 : vector<128xi32> to vector<1x128xi32>
    %189 = vector.broadcast %188 : vector<1x128xi32> to vector<64x128xi32>
    %190 = arith.cmpi eq, %189, %6 : vector<64x128xi32>
    %191 = arith.extui %190 : vector<64x128xi1> to vector<64x128xi32>
    %192 = arith.addi %185, %191 : vector<64x128xi32>
    %193 = vector.extract_strided_slice %121 {offsets = [10, 0], sizes = [1, 128], strides = [1, 1]} : vector<16x128xi32> to vector<1x128xi32>
    %194 = vector.shape_cast %193 : vector<1x128xi32> to vector<128xi32>
    %195 = vector.shape_cast %194 : vector<128xi32> to vector<1x128xi32>
    %196 = vector.broadcast %195 : vector<1x128xi32> to vector<64x128xi32>
    %197 = arith.cmpi eq, %196, %6 : vector<64x128xi32>
    %198 = arith.extui %197 : vector<64x128xi1> to vector<64x128xi32>
    %199 = arith.addi %192, %198 : vector<64x128xi32>
    %200 = vector.extract_strided_slice %121 {offsets = [11, 0], sizes = [1, 128], strides = [1, 1]} : vector<16x128xi32> to vector<1x128xi32>
    %201 = vector.shape_cast %200 : vector<1x128xi32> to vector<128xi32>
    %202 = vector.shape_cast %201 : vector<128xi32> to vector<1x128xi32>
    %203 = vector.broadcast %202 : vector<1x128xi32> to vector<64x128xi32>
    %204 = arith.cmpi eq, %203, %6 : vector<64x128xi32>
    %205 = arith.extui %204 : vector<64x128xi1> to vector<64x128xi32>
    %206 = arith.addi %199, %205 : vector<64x128xi32>
    %207 = vector.extract_strided_slice %121 {offsets = [12, 0], sizes = [1, 128], strides = [1, 1]} : vector<16x128xi32> to vector<1x128xi32>
    %208 = vector.shape_cast %207 : vector<1x128xi32> to vector<128xi32>
    %209 = vector.shape_cast %208 : vector<128xi32> to vector<1x128xi32>
    %210 = vector.broadcast %209 : vector<1x128xi32> to vector<64x128xi32>
    %211 = arith.cmpi eq, %210, %6 : vector<64x128xi32>
    %212 = arith.extui %211 : vector<64x128xi1> to vector<64x128xi32>
    %213 = arith.addi %206, %212 : vector<64x128xi32>
    %214 = vector.extract_strided_slice %121 {offsets = [13, 0], sizes = [1, 128], strides = [1, 1]} : vector<16x128xi32> to vector<1x128xi32>
    %215 = vector.shape_cast %214 : vector<1x128xi32> to vector<128xi32>
    %216 = vector.shape_cast %215 : vector<128xi32> to vector<1x128xi32>
    %217 = vector.broadcast %216 : vector<1x128xi32> to vector<64x128xi32>
    %218 = arith.cmpi eq, %217, %6 : vector<64x128xi32>
    %219 = arith.extui %218 : vector<64x128xi1> to vector<64x128xi32>
    %220 = arith.addi %213, %219 : vector<64x128xi32>
    %221 = vector.extract_strided_slice %121 {offsets = [14, 0], sizes = [1, 128], strides = [1, 1]} : vector<16x128xi32> to vector<1x128xi32>
    %222 = vector.shape_cast %221 : vector<1x128xi32> to vector<128xi32>
    %223 = vector.shape_cast %222 : vector<128xi32> to vector<1x128xi32>
    %224 = vector.broadcast %223 : vector<1x128xi32> to vector<64x128xi32>
    %225 = arith.cmpi eq, %224, %6 : vector<64x128xi32>
    %226 = arith.extui %225 : vector<64x128xi1> to vector<64x128xi32>
    %227 = arith.addi %220, %226 : vector<64x128xi32>
    %228 = vector.extract_strided_slice %121 {offsets = [15, 0], sizes = [1, 128], strides = [1, 1]} : vector<16x128xi32> to vector<1x128xi32>
    %229 = vector.shape_cast %228 : vector<1x128xi32> to vector<128xi32>
    %230 = vector.shape_cast %229 : vector<128xi32> to vector<1x128xi32>
    %231 = vector.broadcast %230 : vector<1x128xi32> to vector<64x128xi32>
    %232 = arith.cmpi eq, %231, %6 : vector<64x128xi32>
    %233 = arith.extui %232 : vector<64x128xi1> to vector<64x128xi32>
    %234 = arith.addi %227, %233 : vector<64x128xi32>
    %235 = tpu.concatenate %120, %234 in 0 : vector<64x128xi32>, vector<64x128xi32> -> vector<128x128xi32>
    %236 = arith.sitofp %235 : vector<128x128xi32> to vector<128x128xbf16>
    %c0_6 = arith.constant 0 : index
    %c0_7 = arith.constant 0 : index
    %237 = vector.load %arg7[%c0_6, %c0_7] : memref<32x128xf32, #tpu.memory_space<vmem>>, vector<32x128xf32>
    %c0_8 = arith.constant 0 : index
    %c0_9 = arith.constant 0 : index
    %238 = vector.load %arg4[%c0_8, %c0_9] : memref<32x128xbf16, #tpu.memory_space<vmem>>, vector<32x128xbf16>
    %cst = arith.constant dense<0.000000e+00> : vector<32x128xf32>
    %239 = tpu.matmul %238, %236, %cst {dimension_numbers = #tpu.dot_dimension_numbers<[1], [0], [0], [1], [0, 0, 1, 1], [], []>} : vector<32x128xbf16>, vector<128x128xbf16>, vector<32x128xf32> -> vector<32x128xf32>
    %240 = arith.addf %237, %239 : vector<32x128xf32>
    %c0_10 = arith.constant 0 : index
    %c0_11 = arith.constant 0 : index
    %241 = vector.load %arg7[%c0_10, %c0_11] : memref<32x128xf32, #tpu.memory_space<vmem>>, vector<32x128xf32>
    tpu.vector_store %arg7[%c0_10, %c0_11], %240 {strides = array<i32>} : memref<32x128xf32, #tpu.memory_space<vmem>>, vector<32x128xf32>,
    %c0_i32_12 = arith.constant 0 : i32
    %242 = arith.cmpi eq, %arg1, %c0_i32_12 : i32
    %243 = arith.extui %242 : i1 to i32
    %c0_i32_13 = arith.constant 0 : i32
    %244 = arith.cmpi ne, %243, %c0_i32_13 : i32
    scf.if %244 {
      %c0_14 = arith.constant 0 : index
      %c0_15 = arith.constant 0 : index
      %245 = vector.load %arg7[%c0_14, %c0_15] : memref<32x128xf32, #tpu.memory_space<vmem>>, vector<32x128xf32>
      %c0_16 = arith.constant 0 : index
      %c0_17 = arith.constant 0 : index
      %246 = vector.load %arg5[%c0_16, %c0_17] : memref<32x1xf32, #tpu.memory_space<vmem>>, vector<32x1xf32>
      %247 = vector.broadcast %246 : vector<32x1xf32> to vector<32x128xf32>
      %248 = arith.addf %245, %247 : vector<32x128xf32>
      %249 = math.tanh %248 : vector<32x128xf32>
      %c0_18 = arith.constant 0 : index
      %c0_19 = arith.constant 0 : index
      %250 = vector.load %arg6[%c0_18, %c0_19] : memref<32x128xf32, #tpu.memory_space<vmem>>, vector<32x128xf32>
      tpu.vector_store %arg6[%c0_18, %c0_19], %249 {strides = array<i32>} : memref<32x128xf32, #tpu.memory_space<vmem>>, vector<32x128xf32>,
    } else {
    }
    return
  }
  func.func @transform_0(%arg0: i32, %arg1: i32) -> (i32, i32) {
    %c0_i32 = arith.constant 0 : i32
    %c0_i32_0 = arith.constant 0 : i32
    return %c0_i32, %arg0 : i32, i32
  }
  func.func @transform_1(%arg0: i32, %arg1: i32) -> (i32, i32) {
    %c0_i32 = arith.constant 0 : i32
    %c0_i32_0 = arith.constant 0 : i32
    return %c0_i32, %arg0 : i32, i32
  }
  func.func @transform_2(%arg0: i32, %arg1: i32) -> (i32, i32) {
    %c0_i32 = arith.constant 0 : i32
    %c0_i32_0 = arith.constant 0 : i32
    return %c0_i32, %arg1 : i32, i32
  }
  func.func @transform_3(%arg0: i32, %arg1: i32) -> (i32, i32) {
    %c0_i32 = arith.constant 0 : i32
    %c0_i32_0 = arith.constant 0 : i32
    %c0_i32_1 = arith.constant 0 : i32
    return %c0_i32, %c0_i32_0 : i32, i32
  }
  func.func @transform_4(%arg0: i32, %arg1: i32) -> (i32, i32) {
    %c0_i32 = arith.constant 0 : i32
    %c0_i32_0 = arith.constant 0 : i32
    return %c0_i32, %arg0 : i32, i32
  }
}

</mosaic_0001>

<llo_original>
// kernel: tpu_custom_call.1
$region0: #{tpu_custom_call.1}
  #allocation0 [shape = 'u32[]', space=smem, size = 0x4, offset = 0x4, fixed_abs, tag = 'smem constant byte address 0x4 - core index']
  #allocation1 [shape = 'u32[144,128]{1,0:T(1,128)}', space=vmem, size = 0x12000, scoped, tag = 'internal scratch']
  #allocation2 [shape = 'f32[32,128]{1,0:T(8,128)}', space=vmem, size = 0x4000, scoped, tag = 'scratch operand']
  %s0 = inlined_call_operand.vmem [shape: s32[16,128], index: 0, kind: input, shape index: {}]
  %s1 = inlined_call_operand.vmem [shape: s32[16,128], index: 1, kind: input, shape index: {}]
  %s2 = inlined_call_operand.hbm [shape: bf16[32,128], index: 2, kind: input, shape index: {}]
  %s3 = inlined_call_operand.vmem [shape: f32[32,1], index: 3, kind: input, shape index: {}]
  %s4 = inlined_call_operand.hbm [shape: f32[32,128], index: 4, kind: output, shape index: {}]
  %s5 = sld [smem:[#allocation0]]
  $region38: #{tpu_custom_call.1} parent=0
    _
  %s7 = ssub.s32 1, %s5
  %s8 = scalar_select 0, %s7, %s5
  $region1: #{tpu_custom_call.1} parent=0
    #allocation3 [shape = 'u8[8192]{0}', space=vmem, size = 0x2000, scoped, tag = 'input window, operand 2, single buffered']
    #allocation4 [shape = 's32[1]{0}', space=sflag, size = 0x4, scoped, tag = 'scoped memory for tpu_custom_call.1']
    #allocation5 [shape = 's32[1]{0}', space=sflag, size = 0x4, scoped, tag = 'scoped memory for tpu_custom_call.1']
    #allocation6 [shape = 'u8[16384]{0}', space=vmem, size = 0x4000, scoped, tag = 'output window, operand 0, single buffered']
    %9 = vsyncpa [#allocation4], 0
    %10 = vsyncpa [#allocation5], 0
    // Predicated region
    $region2: #{tpu_custom_call.1} parent=1 // pred_check
      _
    $region3: #{tpu_custom_call.1} parent=1 // pred_check_branch
      %12 = sbr.rel (0) target = $region5
    $region4: #{tpu_custom_call.1} parent=1 // pred_region
      _
    $region5: #{tpu_custom_call.1} parent=1 // pred_fallthru
      _
    // Predicated region
    $region6: #{tpu_custom_call.1} parent=1 // pred_check
      _
    $region7: #{tpu_custom_call.1} parent=1 // pred_check_branch
      %14 = sbr.rel (0) target = $region9
    $region8: #{tpu_custom_call.1} parent=1 // pred_region
      _
    $region9: #{tpu_custom_call.1} parent=1 // pred_fallthru
      _
    // Predicated region
    $region10: #{tpu_custom_call.1} parent=1 // pred_check
      _
    $region11: #{tpu_custom_call.1} parent=1 // pred_check_branch
      %16 = sbr.rel (0) target = $region13
    $region12: #{tpu_custom_call.1} parent=1 // pred_region
      %s18 = ssub.s32 256, 256
      %19 = vsyncadd [#allocation4], %s18
      %s20 = sshll.u32 [#allocation3], 4
      %s21 = int_to_ptr.vmem [resolvable:$true] %s20
      %26 = dma.hbm_to_vmem [thread:$0]  %s2, 256, %s21, [#allocation4], 64, 64, 4
    $region13: #{tpu_custom_call.1} parent=1 // pred_fallthru
      _
    // Predicated region
    $region14: #{tpu_custom_call.1} parent=1 // pred_check
      _
    $region15: #{tpu_custom_call.1} parent=1 // pred_check_branch
      %28 = sbr.rel (0) target = $region17
    $region16: #{tpu_custom_call.1} parent=1 // pred_region
      _
    $region17: #{tpu_custom_call.1} parent=1 // pred_fallthru
      _
    // Predicated region
    $region18: #{tpu_custom_call.1} parent=1 // pred_check
      _
    $region19: #{tpu_custom_call.1} parent=1 // pred_check_branch
      %30 = sbr.rel (0) target = $region21
    $region20: #{tpu_custom_call.1} parent=1 // pred_region
      %31 = dma.done [#allocation4], 256
    $region21: #{tpu_custom_call.1} parent=1 // pred_fallthru
      _
    %p33 = scmp.eq.s32.totalorder 0, 0
    // Predicated region
    $region22: #{tpu_custom_call.1} parent=1 // pred_check
      %p34 = pneg %p33
    $region23: #{tpu_custom_call.1} parent=1 // pred_check_branch
      %36 = sbr.rel (%p34) target = $region25
    $region24: #{tpu_custom_call.1} parent=1 // pred_region
      %37 = vst [vmem:[#allocation2] sm:$0xff] 0.0
      %38 = vst [vmem:[#allocation2 + $0x8] sm:$0xff] 0.0
      %39 = vst [vmem:[#allocation2 + $0x10] sm:$0xff] 0.0
      %40 = vst [vmem:[#allocation2 + $0x18] sm:$0xff] 0.0
    $region25: #{tpu_custom_call.1} parent=1 // pred_fallthru
      _
    %s41 = smul.u32 0, 64
    %v42 = vlaneseq
    %v43 = vshrl.u32 %v42, 7
    %v44 = vadd.s32 %v43, 8
    %v45 = vadd.s32 %v43, 16
    %v46 = vadd.s32 %v43, 24
    %v47 = vadd.s32 %v43, 32
    %v48 = vadd.s32 %v43, 40
    %v49 = vadd.s32 %v43, 48
    %v50 = vadd.s32 %v43, 56
    %v51 = vstv %s41
    %v52 = vadd.s32 %v43, %v51
    %v53 = vadd.s32 %v44, %v51
    %v54 = vadd.s32 %v45, %v51
    %v55 = vadd.s32 %v46, %v51
    %v56 = vadd.s32 %v47, %v51
    %v57 = vadd.s32 %v48, %v51
    %v58 = vadd.s32 %v49, %v51
    %v59 = vadd.s32 %v50, %v51
    %v60 = vld [vmem:[%s0] sm:$0xff]
    %v61 = vld [vmem:[%s0 + $0x8] sm:$0xff]
    %v62 = vlaneseq
    %v63 = vshrl.u32 %v62, 7
    %v64 = vsub.s32 0, %v63
    %v65 = vrot.slane %v60, %v64
    %vm66 = vcmp.eq.s32.totalorder %v65, %v52
    %vm67 = vcmp.eq.s32.totalorder %v65, %v53
    %vm68 = vcmp.eq.s32.totalorder %v65, %v54
    %vm69 = vcmp.eq.s32.totalorder %v65, %v55
    %vm70 = vcmp.eq.s32.totalorder %v65, %v56
    %vm71 = vcmp.eq.s32.totalorder %v65, %v57
    %vm72 = vcmp.eq.s32.totalorder %v65, %v58
    %vm73 = vcmp.eq.s32.totalorder %v65, %v59
    %v74 = vsel %vm66, 1, 0
    %v75 = vsel %vm67, 1, 0
    %v76 = vsel %vm68, 1, 0
    %v77 = vsel %vm69, 1, 0
    %v78 = vsel %vm70, 1, 0
    %v79 = vsel %vm71, 1, 0
    %v80 = vsel %vm72, 1, 0
    %v81 = vsel %vm73, 1, 0
    %v82 = vlaneseq
    %v83 = vshrl.u32 %v82, 7
    %v84 = vsub.s32 1, %v83
    %v85 = vrot.slane %v60, %v84
    %vm86 = vcmp.eq.s32.totalorder %v85, %v52
    %vm87 = vcmp.eq.s32.totalorder %v85, %v53
    %vm88 = vcmp.eq.s32.totalorder %v85, %v54
    %vm89 = vcmp.eq.s32.totalorder %v85, %v55
    %vm90 = vcmp.eq.s32.totalorder %v85, %v56
    %vm91 = vcmp.eq.s32.totalorder %v85, %v57
    %vm92 = vcmp.eq.s32.totalorder %v85, %v58
    %vm93 = vcmp.eq.s32.totalorder %v85, %v59
    %v94 = vsel %vm86, 1, 0
    %v95 = vsel %vm87, 1, 0
    %v96 = vsel %vm88, 1, 0
    %v97 = vsel %vm89, 1, 0
    %v98 = vsel %vm90, 1, 0
    %v99 = vsel %vm91, 1, 0
    %v100 = vsel %vm92, 1, 0
    %v101 = vsel %vm93, 1, 0
    %v102 = vadd.s32 %v74, %v94
    %v103 = vadd.s32 %v75, %v95
    %v104 = vadd.s32 %v76, %v96
    %v105 = vadd.s32 %v77, %v97
    %v106 = vadd.s32 %v78, %v98
    %v107 = vadd.s32 %v79, %v99
    %v108 = vadd.s32 %v80, %v100
    %v109 = vadd.s32 %v81, %v101
    %v110 = vlaneseq
    %v111 = vshrl.u32 %v110, 7
    %v112 = vsub.s32 2, %v111
    %v113 = vrot.slane %v60, %v112
    %vm114 = vcmp.eq.s32.totalorder %v113, %v52
    %vm115 = vcmp.eq.s32.totalorder %v113, %v53
    %vm116 = vcmp.eq.s32.totalorder %v113, %v54
    %vm117 = vcmp.eq.s32.totalorder %v113, %v55
    %vm118 = vcmp.eq.s32.totalorder %v113, %v56
    %vm119 = vcmp.eq.s32.totalorder %v113, %v57
    %vm120 = vcmp.eq.s32.totalorder %v113, %v58
    %vm121 = vcmp.eq.s32.totalorder %v113, %v59
    %v122 = vsel %vm114, 1, 0
    %v123 = vsel %vm115, 1, 0
    %v124 = vsel %vm116, 1, 0
    %v125 = vsel %vm117, 1, 0
    %v126 = vsel %vm118, 1, 0
    %v127 = vsel %vm119, 1, 0
    %v128 = vsel %vm120, 1, 0
    %v129 = vsel %vm121, 1, 0
    %v130 = vadd.s32 %v102, %v122
    %v131 = vadd.s32 %v103, %v123
    %v132 = vadd.s32 %v104, %v124
    %v133 = vadd.s32 %v105, %v125
    %v134 = vadd.s32 %v106, %v126
    %v135 = vadd.s32 %v107, %v127
    %v136 = vadd.s32 %v108, %v128
    %v137 = vadd.s32 %v109, %v129
    %v138 = vlaneseq
    %v139 = vshrl.u32 %v138, 7
    %v140 = vsub.s32 3, %v139
    %v141 = vrot.slane %v60, %v140
    %vm142 = vcmp.eq.s32.totalorder %v141, %v52
    %vm143 = vcmp.eq.s32.totalorder %v141, %v53
    %vm144 = vcmp.eq.s32.totalorder %v141, %v54
    %vm145 = vcmp.eq.s32.totalorder %v141, %v55
    %vm146 = vcmp.eq.s32.totalorder %v141, %v56
    %vm147 = vcmp.eq.s32.totalorder %v141, %v57
    %vm148 = vcmp.eq.s32.totalorder %v141, %v58
    %vm149 = vcmp.eq.s32.totalorder %v141, %v59
    %v150 = vsel %vm142, 1, 0
    %v151 = vsel %vm143, 1, 0
    %v152 = vsel %vm144, 1, 0
    %v153 = vsel %vm145, 1, 0
    %v154 = vsel %vm146, 1, 0
    %v155 = vsel %vm147, 1, 0
    %v156 = vsel %vm148, 1, 0
    %v157 = vsel %vm149, 1, 0
    %v158 = vadd.s32 %v130, %v150
    %v159 = vadd.s32 %v131, %v151
    %v160 = vadd.s32 %v132, %v152
    %v161 = vadd.s32 %v133, %v153
    %v162 = vadd.s32 %v134, %v154
    %v163 = vadd.s32 %v135, %v155
    %v164 = vadd.s32 %v136, %v156
    %v165 = vadd.s32 %v137, %v157
    %v166 = vlaneseq
    %v167 = vshrl.u32 %v166, 7
    %v168 = vsub.s32 4, %v167
    %v169 = vrot.slane %v60, %v168
    %vm170 = vcmp.eq.s32.totalorder %v169, %v52
    %vm171 = vcmp.eq.s32.totalorder %v169, %v53
    %vm172 = vcmp.eq.s32.totalorder %v169, %v54
    %vm173 = vcmp.eq.s32.totalorder %v169, %v55
    %vm174 = vcmp.eq.s32.totalorder %v169, %v56
    %vm175 = vcmp.eq.s32.totalorder %v169, %v57
    %vm176 = vcmp.eq.s32.totalorder %v169, %v58
    %vm177 = vcmp.eq.s32.totalorder %v169, %v59
    %v178 = vsel %vm170, 1, 0
    %v179 = vsel %vm171, 1, 0
    %v180 = vsel %vm172, 1, 0
    %v181 = vsel %vm173, 1, 0
    %v182 = vsel %vm174, 1, 0
    %v183 = vsel %vm175, 1, 0
    %v184 = vsel %vm176, 1, 0
    %v185 = vsel %vm177, 1, 0
    %v186 = vadd.s32 %v158, %v178
    %v187 = vadd.s32 %v159, %v179
    %v188 = vadd.s32 %v160, %v180
    %v189 = vadd.s32 %v161, %v181
    %v190 = vadd.s32 %v162, %v182
    %v191 = vadd.s32 %v163, %v183
    %v192 = vadd.s32 %v164, %v184
    %v193 = vadd.s32 %v165, %v185
    %v194 = vlaneseq
    %v195 = vshrl.u32 %v194, 7
    %v196 = vsub.s32 5, %v195
    %v197 = vrot.slane %v60, %v196
    %vm198 = vcmp.eq.s32.totalorder %v197, %v52
    %vm199 = vcmp.eq.s32.totalorder %v197, %v53
    %vm200 = vcmp.eq.s32.totalorder %v197, %v54
    %vm201 = vcmp.eq.s32.totalorder %v197, %v55
    %vm202 = vcmp.eq.s32.totalorder %v197, %v56
    %vm203 = vcmp.eq.s32.totalorder %v197, %v57
    %vm204 = vcmp.eq.s32.totalorder %v197, %v58
    %vm205 = vcmp.eq.s32.totalorder %v197, %v59
    %v206 = vsel %vm198, 1, 0
    %v207 = vsel %vm199, 1, 0
    %v208 = vsel %vm200, 1, 0
    %v209 = vsel %vm201, 1, 0
    %v210 = vsel %vm202, 1, 0
    %v211 = vsel %vm203, 1, 0
    %v212 = vsel %vm204, 1, 0
    %v213 = vsel %vm205, 1, 0
    %v214 = vadd.s32 %v186, %v206
    %v215 = vadd.s32 %v187, %v207
    %v216 = vadd.s32 %v188, %v208
    %v217 = vadd.s32 %v189, %v209
    %v218 = vadd.s32 %v190, %v210
    %v219 = vadd.s32 %v191, %v211
    %v220 = vadd.s32 %v192, %v212
    %v221 = vadd.s32 %v193, %v213
    %v222 = vlaneseq
    %v223 = vshrl.u32 %v222, 7
    %v224 = vsub.s32 6, %v223
    %v225 = vrot.slane %v60, %v224
    %vm226 = vcmp.eq.s32.totalorder %v225, %v52
    %vm227 = vcmp.eq.s32.totalorder %v225, %v53
    %vm228 = vcmp.eq.s32.totalorder %v225, %v54
    %vm229 = vcmp.eq.s32.totalorder %v225, %v55
    %vm230 = vcmp.eq.s32.totalorder %v225, %v56
    %vm231 = vcmp.eq.s32.totalorder %v225, %v57
    %vm232 = vcmp.eq.s32.totalorder %v225, %v58
    %vm233 = vcmp.eq.s32.totalorder %v225, %v59
    %v234 = vsel %vm226, 1, 0
    %v235 = vsel %vm227, 1, 0
    %v236 = vsel %vm228, 1, 0
    %v237 = vsel %vm229, 1, 0
    %v238 = vsel %vm230, 1, 0
    %v239 = vsel %vm231, 1, 0
    %v240 = vsel %vm232, 1, 0
    %v241 = vsel %vm233, 1, 0
    %v242 = vadd.s32 %v214, %v234
    %v243 = vadd.s32 %v215, %v235
    %v244 = vadd.s32 %v216, %v236
    %v245 = vadd.s32 %v217, %v237
    %v246 = vadd.s32 %v218, %v238
    %v247 = vadd.s32 %v219, %v239
    %v248 = vadd.s32 %v220, %v240
    %v249 = vadd.s32 %v221, %v241
    %v250 = vlaneseq
    %v251 = vshrl.u32 %v250, 7
    %v252 = vsub.s32 7, %v251
    %v253 = vrot.slane %v60, %v252
    %vm254 = vcmp.eq.s32.totalorder %v253, %v52
    %vm255 = vcmp.eq.s32.totalorder %v253, %v53
    %vm256 = vcmp.eq.s32.totalorder %v253, %v54
    %vm257 = vcmp.eq.s32.totalorder %v253, %v55
    %vm258 = vcmp.eq.s32.totalorder %v253, %v56
    %vm259 = vcmp.eq.s32.totalorder %v253, %v57
    %vm260 = vcmp.eq.s32.totalorder %v253, %v58
    %vm261 = vcmp.eq.s32.totalorder %v253, %v59
    %v262 = vsel %vm254, 1, 0
    %v263 = vsel %vm255, 1, 0
    %v264 = vsel %vm256, 1, 0
    %v265 = vsel %vm257, 1, 0
    %v266 = vsel %vm258, 1, 0
    %v267 = vsel %vm259, 1, 0
    %v268 = vsel %vm260, 1, 0
    %v269 = vsel %vm261, 1, 0
    %v270 = vadd.s32 %v242, %v262
    %v271 = vadd.s32 %v243, %v263
    %v272 = vadd.s32 %v244, %v264
    %v273 = vadd.s32 %v245, %v265
    %v274 = vadd.s32 %v246, %v266
    %v275 = vadd.s32 %v247, %v267
    %v276 = vadd.s32 %v248, %v268
    %v277 = vadd.s32 %v249, %v269
    %v278 = vlaneseq
    %v279 = vshrl.u32 %v278, 7
    %v280 = vsub.s32 0, %v279
    %v281 = vrot.slane %v61, %v280
    %vm282 = vcmp.eq.s32.totalorder %v281, %v52
    %vm283 = vcmp.eq.s32.totalorder %v281, %v53
    %vm284 = vcmp.eq.s32.totalorder %v281, %v54
    %vm285 = vcmp.eq.s32.totalorder %v281, %v55
    %vm286 = vcmp.eq.s32.totalorder %v281, %v56
    %vm287 = vcmp.eq.s32.totalorder %v281, %v57
    %vm288 = vcmp.eq.s32.totalorder %v281, %v58
    %vm289 = vcmp.eq.s32.totalorder %v281, %v59
    %v290 = vsel %vm282, 1, 0
    %v291 = vsel %vm283, 1, 0
    %v292 = vsel %vm284, 1, 0
    %v293 = vsel %vm285, 1, 0
    %v294 = vsel %vm286, 1, 0
    %v295 = vsel %vm287, 1, 0
    %v296 = vsel %vm288, 1, 0
    %v297 = vsel %vm289, 1, 0
    %v298 = vadd.s32 %v270, %v290
    %v299 = vadd.s32 %v271, %v291
    %v300 = vadd.s32 %v272, %v292
    %v301 = vadd.s32 %v273, %v293
    %v302 = vadd.s32 %v274, %v294
    %v303 = vadd.s32 %v275, %v295
    %v304 = vadd.s32 %v276, %v296
    %v305 = vadd.s32 %v277, %v297
    %v306 = vlaneseq
    %v307 = vshrl.u32 %v306, 7
    %v308 = vsub.s32 1, %v307
    %v309 = vrot.slane %v61, %v308
    %vm310 = vcmp.eq.s32.totalorder %v309, %v52
    %vm311 = vcmp.eq.s32.totalorder %v309, %v53
    %vm312 = vcmp.eq.s32.totalorder %v309, %v54
    %vm313 = vcmp.eq.s32.totalorder %v309, %v55
    %vm314 = vcmp.eq.s32.totalorder %v309, %v56
    %vm315 = vcmp.eq.s32.totalorder %v309, %v57
    %vm316 = vcmp.eq.s32.totalorder %v309, %v58
    %vm317 = vcmp.eq.s32.totalorder %v309, %v59
    %v318 = vsel %vm310, 1, 0
    %v319 = vsel %vm311, 1, 0
    %v320 = vsel %vm312, 1, 0
    %v321 = vsel %vm313, 1, 0
    %v322 = vsel %vm314, 1, 0
    %v323 = vsel %vm315, 1, 0
    %v324 = vsel %vm316, 1, 0
    %v325 = vsel %vm317, 1, 0
    %v326 = vadd.s32 %v298, %v318
    %v327 = vadd.s32 %v299, %v319
    %v328 = vadd.s32 %v300, %v320
    %v329 = vadd.s32 %v301, %v321
    %v330 = vadd.s32 %v302, %v322
    %v331 = vadd.s32 %v303, %v323
    %v332 = vadd.s32 %v304, %v324
    %v333 = vadd.s32 %v305, %v325
    %v334 = vlaneseq
    %v335 = vshrl.u32 %v334, 7
    %v336 = vsub.s32 2, %v335
    %v337 = vrot.slane %v61, %v336
    %vm338 = vcmp.eq.s32.totalorder %v337, %v52
    %vm339 = vcmp.eq.s32.totalorder %v337, %v53
    %vm340 = vcmp.eq.s32.totalorder %v337, %v54
    %vm341 = vcmp.eq.s32.totalorder %v337, %v55
    %vm342 = vcmp.eq.s32.totalorder %v337, %v56
    %vm343 = vcmp.eq.s32.totalorder %v337, %v57
    %vm344 = vcmp.eq.s32.totalorder %v337, %v58
    %vm345 = vcmp.eq.s32.totalorder %v337, %v59
    %v346 = vsel %vm338, 1, 0
    %v347 = vsel %vm339, 1, 0
    %v348 = vsel %vm340, 1, 0
    %v349 = vsel %vm341, 1, 0
    %v350 = vsel %vm342, 1, 0
    %v351 = vsel %vm343, 1, 0
    %v352 = vsel %vm344, 1, 0
    %v353 = vsel %vm345, 1, 0
    %v354 = vadd.s32 %v326, %v346
    %v355 = vadd.s32 %v327, %v347
    %v356 = vadd.s32 %v328, %v348
    %v357 = vadd.s32 %v329, %v349
    %v358 = vadd.s32 %v330, %v350
    %v359 = vadd.s32 %v331, %v351
    %v360 = vadd.s32 %v332, %v352
    %v361 = vadd.s32 %v333, %v353
    %v362 = vlaneseq
    %v363 = vshrl.u32 %v362, 7
    %v364 = vsub.s32 3, %v363
    %v365 = vrot.slane %v61, %v364
    %vm366 = vcmp.eq.s32.totalorder %v365, %v52
    %vm367 = vcmp.eq.s32.totalorder %v365, %v53
    %vm368 = vcmp.eq.s32.totalorder %v365, %v54
    %vm369 = vcmp.eq.s32.totalorder %v365, %v55
    %vm370 = vcmp.eq.s32.totalorder %v365, %v56
    %vm371 = vcmp.eq.s32.totalorder %v365, %v57
    %vm372 = vcmp.eq.s32.totalorder %v365, %v58
    %vm373 = vcmp.eq.s32.totalorder %v365, %v59
    %v374 = vsel %vm366, 1, 0
    %v375 = vsel %vm367, 1, 0
    %v376 = vsel %vm368, 1, 0
    %v377 = vsel %vm369, 1, 0
    %v378 = vsel %vm370, 1, 0
    %v379 = vsel %vm371, 1, 0
    %v380 = vsel %vm372, 1, 0
    %v381 = vsel %vm373, 1, 0
    %v382 = vadd.s32 %v354, %v374
    %v383 = vadd.s32 %v355, %v375
    %v384 = vadd.s32 %v356, %v376
    %v385 = vadd.s32 %v357, %v377
    %v386 = vadd.s32 %v358, %v378
    %v387 = vadd.s32 %v359, %v379
    %v388 = vadd.s32 %v360, %v380
    %v389 = vadd.s32 %v361, %v381
    %v390 = vlaneseq
    %v391 = vshrl.u32 %v390, 7
    %v392 = vsub.s32 4, %v391
    %v393 = vrot.slane %v61, %v392
    %vm394 = vcmp.eq.s32.totalorder %v393, %v52
    %vm395 = vcmp.eq.s32.totalorder %v393, %v53
    %vm396 = vcmp.eq.s32.totalorder %v393, %v54
    %vm397 = vcmp.eq.s32.totalorder %v393, %v55
    %vm398 = vcmp.eq.s32.totalorder %v393, %v56
    %vm399 = vcmp.eq.s32.totalorder %v393, %v57
    %vm400 = vcmp.eq.s32.totalorder %v393, %v58
    %vm401 = vcmp.eq.s32.totalorder %v393, %v59
    %v402 = vsel %vm394, 1, 0
    %v403 = vsel %vm395, 1, 0
    %v404 = vsel %vm396, 1, 0
    %v405 = vsel %vm397, 1, 0
    %v406 = vsel %vm398, 1, 0
    %v407 = vsel %vm399, 1, 0
    %v408 = vsel %vm400, 1, 0
    %v409 = vsel %vm401, 1, 0
    %v410 = vadd.s32 %v382, %v402
    %v411 = vadd.s32 %v383, %v403
    %v412 = vadd.s32 %v384, %v404
    %v413 = vadd.s32 %v385, %v405
    %v414 = vadd.s32 %v386, %v406
    %v415 = vadd.s32 %v387, %v407
    %v416 = vadd.s32 %v388, %v408
    %v417 = vadd.s32 %v389, %v409
    %v418 = vlaneseq
    %v419 = vshrl.u32 %v418, 7
    %v420 = vsub.s32 5, %v419
    %v421 = vrot.slane %v61, %v420
    %vm422 = vcmp.eq.s32.totalorder %v421, %v52
    %vm423 = vcmp.eq.s32.totalorder %v421, %v53
    %vm424 = vcmp.eq.s32.totalorder %v421, %v54
    %vm425 = vcmp.eq.s32.totalorder %v421, %v55
    %vm426 = vcmp.eq.s32.totalorder %v421, %v56
    %vm427 = vcmp.eq.s32.totalorder %v421, %v57
    %vm428 = vcmp.eq.s32.totalorder %v421, %v58
    %vm429 = vcmp.eq.s32.totalorder %v421, %v59
    %v430 = vsel %vm422, 1, 0
    %v431 = vsel %vm423, 1, 0
    %v432 = vsel %vm424, 1, 0
    %v433 = vsel %vm425, 1, 0
    %v434 = vsel %vm426, 1, 0
    %v435 = vsel %vm427, 1, 0
    %v436 = vsel %vm428, 1, 0
    %v437 = vsel %vm429, 1, 0
    %v438 = vadd.s32 %v410, %v430
    %v439 = vadd.s32 %v411, %v431
    %v440 = vadd.s32 %v412, %v432
    %v441 = vadd.s32 %v413, %v433
    %v442 = vadd.s32 %v414, %v434
    %v443 = vadd.s32 %v415, %v435
    %v444 = vadd.s32 %v416, %v436
    %v445 = vadd.s32 %v417, %v437
    %v446 = vlaneseq
    %v447 = vshrl.u32 %v446, 7
    %v448 = vsub.s32 6, %v447
    %v449 = vrot.slane %v61, %v448
    %vm450 = vcmp.eq.s32.totalorder %v449, %v52
    %vm451 = vcmp.eq.s32.totalorder %v449, %v53
    %vm452 = vcmp.eq.s32.totalorder %v449, %v54
    %vm453 = vcmp.eq.s32.totalorder %v449, %v55
    %vm454 = vcmp.eq.s32.totalorder %v449, %v56
    %vm455 = vcmp.eq.s32.totalorder %v449, %v57
    %vm456 = vcmp.eq.s32.totalorder %v449, %v58
    %vm457 = vcmp.eq.s32.totalorder %v449, %v59
    %v458 = vsel %vm450, 1, 0
    %v459 = vsel %vm451, 1, 0
    %v460 = vsel %vm452, 1, 0
    %v461 = vsel %vm453, 1, 0
    %v462 = vsel %vm454, 1, 0
    %v463 = vsel %vm455, 1, 0
    %v464 = vsel %vm456, 1, 0
    %v465 = vsel %vm457, 1, 0
    %v466 = vadd.s32 %v438, %v458
    %v467 = vadd.s32 %v439, %v459
    %v468 = vadd.s32 %v440, %v460
    %v469 = vadd.s32 %v441, %v461
    %v470 = vadd.s32 %v442, %v462
    %v471 = vadd.s32 %v443, %v463
    %v472 = vadd.s32 %v444, %v464
    %v473 = vadd.s32 %v445, %v465
    %v474 = vlaneseq
    %v475 = vshrl.u32 %v474, 7
    %v476 = vsub.s32 7, %v475
    %v477 = vrot.slane %v61, %v476
    %vm478 = vcmp.eq.s32.totalorder %v477, %v52
    %vm479 = vcmp.eq.s32.totalorder %v477, %v53
    %vm480 = vcmp.eq.s32.totalorder %v477, %v54
    %vm481 = vcmp.eq.s32.totalorder %v477, %v55
    %vm482 = vcmp.eq.s32.totalorder %v477, %v56
    %vm483 = vcmp.eq.s32.totalorder %v477, %v57
    %vm484 = vcmp.eq.s32.totalorder %v477, %v58
    %vm485 = vcmp.eq.s32.totalorder %v477, %v59
    %v486 = vsel %vm478, 1, 0
    %v487 = vsel %vm479, 1, 0
    %v488 = vsel %vm480, 1, 0
    %v489 = vsel %vm481, 1, 0
    %v490 = vsel %vm482, 1, 0
    %v491 = vsel %vm483, 1, 0
    %v492 = vsel %vm484, 1, 0
    %v493 = vsel %vm485, 1, 0
    %v494 = vadd.s32 %v466, %v486
    %v495 = vadd.s32 %v467, %v487
    %v496 = vadd.s32 %v468, %v488
    %v497 = vadd.s32 %v469, %v489
    %v498 = vadd.s32 %v470, %v490
    %v499 = vadd.s32 %v471, %v491
    %v500 = vadd.s32 %v472, %v492
    %v501 = vadd.s32 %v473, %v493
    %v502 = vld [vmem:[%s1] sm:$0xff]
    %v503 = vld [vmem:[%s1 + $0x8] sm:$0xff]
    %v504 = vlaneseq
    %v505 = vshrl.u32 %v504, 7
    %v506 = vsub.s32 0, %v505
    %v507 = vrot.slane %v502, %v506
    %vm508 = vcmp.eq.s32.totalorder %v507, %v52
    %vm509 = vcmp.eq.s32.totalorder %v507, %v53
    %vm510 = vcmp.eq.s32.totalorder %v507, %v54
    %vm511 = vcmp.eq.s32.totalorder %v507, %v55
    %vm512 = vcmp.eq.s32.totalorder %v507, %v56
    %vm513 = vcmp.eq.s32.totalorder %v507, %v57
    %vm514 = vcmp.eq.s32.totalorder %v507, %v58
    %vm515 = vcmp.eq.s32.totalorder %v507, %v59
    %v516 = vsel %vm508, 1, 0
    %v517 = vsel %vm509, 1, 0
    %v518 = vsel %vm510, 1, 0
    %v519 = vsel %vm511, 1, 0
    %v520 = vsel %vm512, 1, 0
    %v521 = vsel %vm513, 1, 0
    %v522 = vsel %vm514, 1, 0
    %v523 = vsel %vm515, 1, 0
    %v524 = vlaneseq
    %v525 = vshrl.u32 %v524, 7
    %v526 = vsub.s32 1, %v525
    %v527 = vrot.slane %v502, %v526
    %vm528 = vcmp.eq.s32.totalorder %v527, %v52
    %vm529 = vcmp.eq.s32.totalorder %v527, %v53
    %vm530 = vcmp.eq.s32.totalorder %v527, %v54
    %vm531 = vcmp.eq.s32.totalorder %v527, %v55
    %vm532 = vcmp.eq.s32.totalorder %v527, %v56
    %vm533 = vcmp.eq.s32.totalorder %v527, %v57
    %vm534 = vcmp.eq.s32.totalorder %v527, %v58
    %vm535 = vcmp.eq.s32.totalorder %v527, %v59
    %v536 = vsel %vm528, 1, 0
    %v537 = vsel %vm529, 1, 0
    %v538 = vsel %vm530, 1, 0
    %v539 = vsel %vm531, 1, 0
    %v540 = vsel %vm532, 1, 0
    %v541 = vsel %vm533, 1, 0
    %v542 = vsel %vm534, 1, 0
    %v543 = vsel %vm535, 1, 0
    %v544 = vadd.s32 %v516, %v536
    %v545 = vadd.s32 %v517, %v537
    %v546 = vadd.s32 %v518, %v538
    %v547 = vadd.s32 %v519, %v539
    %v548 = vadd.s32 %v520, %v540
    %v549 = vadd.s32 %v521, %v541
    %v550 = vadd.s32 %v522, %v542
    %v551 = vadd.s32 %v523, %v543
    %v552 = vlaneseq
    %v553 = vshrl.u32 %v552, 7
    %v554 = vsub.s32 2, %v553
    %v555 = vrot.slane %v502, %v554
    %vm556 = vcmp.eq.s32.totalorder %v555, %v52
    %vm557 = vcmp.eq.s32.totalorder %v555, %v53
    %vm558 = vcmp.eq.s32.totalorder %v555, %v54
    %vm559 = vcmp.eq.s32.totalorder %v555, %v55
    %vm560 = vcmp.eq.s32.totalorder %v555, %v56
    %vm561 = vcmp.eq.s32.totalorder %v555, %v57
    %vm562 = vcmp.eq.s32.totalorder %v555, %v58
    %vm563 = vcmp.eq.s32.totalorder %v555, %v59
    %v564 = vsel %vm556, 1, 0
    %v565 = vsel %vm557, 1, 0
    %v566 = vsel %vm558, 1, 0
    %v567 = vsel %vm559, 1, 0
    %v568 = vsel %vm560, 1, 0
    %v569 = vsel %vm561, 1, 0
    %v570 = vsel %vm562, 1, 0
    %v571 = vsel %vm563, 1, 0
    %v572 = vadd.s32 %v544, %v564
    %v573 = vadd.s32 %v545, %v565
    %v574 = vadd.s32 %v546, %v566
    %v575 = vadd.s32 %v547, %v567
    %v576 = vadd.s32 %v548, %v568
    %v577 = vadd.s32 %v549, %v569
    %v578 = vadd.s32 %v550, %v570
    %v579 = vadd.s32 %v551, %v571
    %v580 = vlaneseq
    %v581 = vshrl.u32 %v580, 7
    %v582 = vsub.s32 3, %v581
    %v583 = vrot.slane %v502, %v582
    %vm584 = vcmp.eq.s32.totalorder %v583, %v52
    %vm585 = vcmp.eq.s32.totalorder %v583, %v53
    %vm586 = vcmp.eq.s32.totalorder %v583, %v54
    %vm587 = vcmp.eq.s32.totalorder %v583, %v55
    %vm588 = vcmp.eq.s32.totalorder %v583, %v56
    %vm589 = vcmp.eq.s32.totalorder %v583, %v57
    %vm590 = vcmp.eq.s32.totalorder %v583, %v58
    %vm591 = vcmp.eq.s32.totalorder %v583, %v59
    %v592 = vsel %vm584, 1, 0
    %v593 = vsel %vm585, 1, 0
    %v594 = vsel %vm586, 1, 0
    %v595 = vsel %vm587, 1, 0
    %v596 = vsel %vm588, 1, 0
    %v597 = vsel %vm589, 1, 0
    %v598 = vsel %vm590, 1, 0
    %v599 = vsel %vm591, 1, 0
    %v600 = vadd.s32 %v572, %v592
    %v601 = vadd.s32 %v573, %v593
    %v602 = vadd.s32 %v574, %v594
    %v603 = vadd.s32 %v575, %v595
    %v604 = vadd.s32 %v576, %v596
    %v605 = vadd.s32 %v577, %v597
    %v606 = vadd.s32 %v578, %v598
    %v607 = vadd.s32 %v579, %v599
    %v608 = vlaneseq
    %v609 = vshrl.u32 %v608, 7
    %v610 = vsub.s32 4, %v609
    %v611 = vrot.slane %v502, %v610
    %vm612 = vcmp.eq.s32.totalorder %v611, %v52
    %vm613 = vcmp.eq.s32.totalorder %v611, %v53
    %vm614 = vcmp.eq.s32.totalorder %v611, %v54
    %vm615 = vcmp.eq.s32.totalorder %v611, %v55
    %vm616 = vcmp.eq.s32.totalorder %v611, %v56
    %vm617 = vcmp.eq.s32.totalorder %v611, %v57
    %vm618 = vcmp.eq.s32.totalorder %v611, %v58
    %vm619 = vcmp.eq.s32.totalorder %v611, %v59
    %v620 = vsel %vm612, 1, 0
    %v621 = vsel %vm613, 1, 0
    %v622 = vsel %vm614, 1, 0
    %v623 = vsel %vm615, 1, 0
    %v624 = vsel %vm616, 1, 0
    %v625 = vsel %vm617, 1, 0
    %v626 = vsel %vm618, 1, 0
    %v627 = vsel %vm619, 1, 0
    %v628 = vadd.s32 %v600, %v620
    %v629 = vadd.s32 %v601, %v621
    %v630 = vadd.s32 %v602, %v622
    %v631 = vadd.s32 %v603, %v623
    %v632 = vadd.s32 %v604, %v624
    %v633 = vadd.s32 %v605, %v625
    %v634 = vadd.s32 %v606, %v626
    %v635 = vadd.s32 %v607, %v627
    %v636 = vlaneseq
    %v637 = vshrl.u32 %v636, 7
    %v638 = vsub.s32 5, %v637
    %v639 = vrot.slane %v502, %v638
    %vm640 = vcmp.eq.s32.totalorder %v639, %v52
    %vm641 = vcmp.eq.s32.totalorder %v639, %v53
    %vm642 = vcmp.eq.s32.totalorder %v639, %v54
    %vm643 = vcmp.eq.s32.totalorder %v639, %v55
    %vm644 = vcmp.eq.s32.totalorder %v639, %v56
    %vm645 = vcmp.eq.s32.totalorder %v639, %v57
    %vm646 = vcmp.eq.s32.totalorder %v639, %v58
    %vm647 = vcmp.eq.s32.totalorder %v639, %v59
    %v648 = vsel %vm640, 1, 0
    %v649 = vsel %vm641, 1, 0
    %v650 = vsel %vm642, 1, 0
    %v651 = vsel %vm643, 1, 0
    %v652 = vsel %vm644, 1, 0
    %v653 = vsel %vm645, 1, 0
    %v654 = vsel %vm646, 1, 0
    %v655 = vsel %vm647, 1, 0
    %v656 = vadd.s32 %v628, %v648
    %v657 = vadd.s32 %v629, %v649
    %v658 = vadd.s32 %v630, %v650
    %v659 = vadd.s32 %v631, %v651
    %v660 = vadd.s32 %v632, %v652
    %v661 = vadd.s32 %v633, %v653
    %v662 = vadd.s32 %v634, %v654
    %v663 = vadd.s32 %v635, %v655
    %v664 = vlaneseq
    %v665 = vshrl.u32 %v664, 7
    %v666 = vsub.s32 6, %v665
    %v667 = vrot.slane %v502, %v666
    %vm668 = vcmp.eq.s32.totalorder %v667, %v52
    %vm669 = vcmp.eq.s32.totalorder %v667, %v53
    %vm670 = vcmp.eq.s32.totalorder %v667, %v54
    %vm671 = vcmp.eq.s32.totalorder %v667, %v55
    %vm672 = vcmp.eq.s32.totalorder %v667, %v56
    %vm673 = vcmp.eq.s32.totalorder %v667, %v57
    %vm674 = vcmp.eq.s32.totalorder %v667, %v58
    %vm675 = vcmp.eq.s32.totalorder %v667, %v59
    %v676 = vsel %vm668, 1, 0
    %v677 = vsel %vm669, 1, 0
    %v678 = vsel %vm670, 1, 0
    %v679 = vsel %vm671, 1, 0
    %v680 = vsel %vm672, 1, 0
    %v681 = vsel %vm673, 1, 0
    %v682 = vsel %vm674, 1, 0
    %v683 = vsel %vm675, 1, 0
    %v684 = vadd.s32 %v656, %v676
    %v685 = vadd.s32 %v657, %v677
    %v686 = vadd.s32 %v658, %v678
    %v687 = vadd.s32 %v659, %v679
    %v688 = vadd.s32 %v660, %v680
    %v689 = vadd.s32 %v661, %v681
    %v690 = vadd.s32 %v662, %v682
    %v691 = vadd.s32 %v663, %v683
    %v692 = vlaneseq
    %v693 = vshrl.u32 %v692, 7
    %v694 = vsub.s32 7, %v693
    %v695 = vrot.slane %v502, %v694
    %vm696 = vcmp.eq.s32.totalorder %v695, %v52
    %vm697 = vcmp.eq.s32.totalorder %v695, %v53
    %vm698 = vcmp.eq.s32.totalorder %v695, %v54
    %vm699 = vcmp.eq.s32.totalorder %v695, %v55
    %vm700 = vcmp.eq.s32.totalorder %v695, %v56
    %vm701 = vcmp.eq.s32.totalorder %v695, %v57
    %vm702 = vcmp.eq.s32.totalorder %v695, %v58
    %vm703 = vcmp.eq.s32.totalorder %v695, %v59
    %v704 = vsel %vm696, 1, 0
    %v705 = vsel %vm697, 1, 0
    %v706 = vsel %vm698, 1, 0
    %v707 = vsel %vm699, 1, 0
    %v708 = vsel %vm700, 1, 0
    %v709 = vsel %vm701, 1, 0
    %v710 = vsel %vm702, 1, 0
    %v711 = vsel %vm703, 1, 0
    %v712 = vadd.s32 %v684, %v704
    %v713 = vadd.s32 %v685, %v705
    %v714 = vadd.s32 %v686, %v706
    %v715 = vadd.s32 %v687, %v707
    %v716 = vadd.s32 %v688, %v708
    %v717 = vadd.s32 %v689, %v709
    %v718 = vadd.s32 %v690, %v710
    %v719 = vadd.s32 %v691, %v711
    %v720 = vlaneseq
    %v721 = vshrl.u32 %v720, 7
    %v722 = vsub.s32 0, %v721
    %v723 = vrot.slane %v503, %v722
    %vm724 = vcmp.eq.s32.totalorder %v723, %v52
    %vm725 = vcmp.eq.s32.totalorder %v723, %v53
    %vm726 = vcmp.eq.s32.totalorder %v723, %v54
    %vm727 = vcmp.eq.s32.totalorder %v723, %v55
    %vm728 = vcmp.eq.s32.totalorder %v723, %v56
    %vm729 = vcmp.eq.s32.totalorder %v723, %v57
    %vm730 = vcmp.eq.s32.totalorder %v723, %v58
    %vm731 = vcmp.eq.s32.totalorder %v723, %v59
    %v732 = vsel %vm724, 1, 0
    %v733 = vsel %vm725, 1, 0
    %v734 = vsel %vm726, 1, 0
    %v735 = vsel %vm727, 1, 0
    %v736 = vsel %vm728, 1, 0
    %v737 = vsel %vm729, 1, 0
    %v738 = vsel %vm730, 1, 0
    %v739 = vsel %vm731, 1, 0
    %v740 = vadd.s32 %v712, %v732
    %v741 = vadd.s32 %v713, %v733
    %v742 = vadd.s32 %v714, %v734
    %v743 = vadd.s32 %v715, %v735
    %v744 = vadd.s32 %v716, %v736
    %v745 = vadd.s32 %v717, %v737
    %v746 = vadd.s32 %v718, %v738
    %v747 = vadd.s32 %v719, %v739
    %v748 = vlaneseq
    %v749 = vshrl.u32 %v748, 7
    %v750 = vsub.s32 1, %v749
    %v751 = vrot.slane %v503, %v750
    %vm752 = vcmp.eq.s32.totalorder %v751, %v52
    %vm753 = vcmp.eq.s32.totalorder %v751, %v53
    %vm754 = vcmp.eq.s32.totalorder %v751, %v54
    %vm755 = vcmp.eq.s32.totalorder %v751, %v55
    %vm756 = vcmp.eq.s32.totalorder %v751, %v56
    %vm757 = vcmp.eq.s32.totalorder %v751, %v57
    %vm758 = vcmp.eq.s32.totalorder %v751, %v58
    %vm759 = vcmp.eq.s32.totalorder %v751, %v59
    %v760 = vsel %vm752, 1, 0
    %v761 = vsel %vm753, 1, 0
    %v762 = vsel %vm754, 1, 0
    %v763 = vsel %vm755, 1, 0
    %v764 = vsel %vm756, 1, 0
    %v765 = vsel %vm757, 1, 0
    %v766 = vsel %vm758, 1, 0
    %v767 = vsel %vm759, 1, 0
    %v768 = vadd.s32 %v740, %v760
    %v769 = vadd.s32 %v741, %v761
    %v770 = vadd.s32 %v742, %v762
    %v771 = vadd.s32 %v743, %v763
    %v772 = vadd.s32 %v744, %v764
    %v773 = vadd.s32 %v745, %v765
    %v774 = vadd.s32 %v746, %v766
    %v775 = vadd.s32 %v747, %v767
    %v776 = vlaneseq
    %v777 = vshrl.u32 %v776, 7
    %v778 = vsub.s32 2, %v777
    %v779 = vrot.slane %v503, %v778
    %vm780 = vcmp.eq.s32.totalorder %v779, %v52
    %vm781 = vcmp.eq.s32.totalorder %v779, %v53
    %vm782 = vcmp.eq.s32.totalorder %v779, %v54
    %vm783 = vcmp.eq.s32.totalorder %v779, %v55
    %vm784 = vcmp.eq.s32.totalorder %v779, %v56
    %vm785 = vcmp.eq.s32.totalorder %v779, %v57
    %vm786 = vcmp.eq.s32.totalorder %v779, %v58
    %vm787 = vcmp.eq.s32.totalorder %v779, %v59
    %v788 = vsel %vm780, 1, 0
    %v789 = vsel %vm781, 1, 0
    %v790 = vsel %vm782, 1, 0
    %v791 = vsel %vm783, 1, 0
    %v792 = vsel %vm784, 1, 0
    %v793 = vsel %vm785, 1, 0
    %v794 = vsel %vm786, 1, 0
    %v795 = vsel %vm787, 1, 0
    %v796 = vadd.s32 %v768, %v788
    %v797 = vadd.s32 %v769, %v789
    %v798 = vadd.s32 %v770, %v790
    %v799 = vadd.s32 %v771, %v791
    %v800 = vadd.s32 %v772, %v792
    %v801 = vadd.s32 %v773, %v793
    %v802 = vadd.s32 %v774, %v794
    %v803 = vadd.s32 %v775, %v795
    %v804 = vlaneseq
    %v805 = vshrl.u32 %v804, 7
    %v806 = vsub.s32 3, %v805
    %v807 = vrot.slane %v503, %v806
    %vm808 = vcmp.eq.s32.totalorder %v807, %v52
    %vm809 = vcmp.eq.s32.totalorder %v807, %v53
    %vm810 = vcmp.eq.s32.totalorder %v807, %v54
    %vm811 = vcmp.eq.s32.totalorder %v807, %v55
    %vm812 = vcmp.eq.s32.totalorder %v807, %v56
    %vm813 = vcmp.eq.s32.totalorder %v807, %v57
    %vm814 = vcmp.eq.s32.totalorder %v807, %v58
    %vm815 = vcmp.eq.s32.totalorder %v807, %v59
    %v816 = vsel %vm808, 1, 0
    %v817 = vsel %vm809, 1, 0
    %v818 = vsel %vm810, 1, 0
    %v819 = vsel %vm811, 1, 0
    %v820 = vsel %vm812, 1, 0
    %v821 = vsel %vm813, 1, 0
    %v822 = vsel %vm814, 1, 0
    %v823 = vsel %vm815, 1, 0
    %v824 = vadd.s32 %v796, %v816
    %v825 = vadd.s32 %v797, %v817
    %v826 = vadd.s32 %v798, %v818
    %v827 = vadd.s32 %v799, %v819
    %v828 = vadd.s32 %v800, %v820
    %v829 = vadd.s32 %v801, %v821
    %v830 = vadd.s32 %v802, %v822
    %v831 = vadd.s32 %v803, %v823
    %v832 = vlaneseq
    %v833 = vshrl.u32 %v832, 7
    %v834 = vsub.s32 4, %v833
    %v835 = vrot.slane %v503, %v834
    %vm836 = vcmp.eq.s32.totalorder %v835, %v52
    %vm837 = vcmp.eq.s32.totalorder %v835, %v53
    %vm838 = vcmp.eq.s32.totalorder %v835, %v54
    %vm839 = vcmp.eq.s32.totalorder %v835, %v55
    %vm840 = vcmp.eq.s32.totalorder %v835, %v56
    %vm841 = vcmp.eq.s32.totalorder %v835, %v57
    %vm842 = vcmp.eq.s32.totalorder %v835, %v58
    %vm843 = vcmp.eq.s32.totalorder %v835, %v59
    %v844 = vsel %vm836, 1, 0
    %v845 = vsel %vm837, 1, 0
    %v846 = vsel %vm838, 1, 0
    %v847 = vsel %vm839, 1, 0
    %v848 = vsel %vm840, 1, 0
    %v849 = vsel %vm841, 1, 0
    %v850 = vsel %vm842, 1, 0
    %v851 = vsel %vm843, 1, 0
    %v852 = vadd.s32 %v824, %v844
    %v853 = vadd.s32 %v825, %v845
    %v854 = vadd.s32 %v826, %v846
    %v855 = vadd.s32 %v827, %v847
    %v856 = vadd.s32 %v828, %v848
    %v857 = vadd.s32 %v829, %v849
    %v858 = vadd.s32 %v830, %v850
    %v859 = vadd.s32 %v831, %v851
    %v860 = vlaneseq
    %v861 = vshrl.u32 %v860, 7
    %v862 = vsub.s32 5, %v861
    %v863 = vrot.slane %v503, %v862
    %vm864 = vcmp.eq.s32.totalorder %v863, %v52
    %vm865 = vcmp.eq.s32.totalorder %v863, %v53
    %vm866 = vcmp.eq.s32.totalorder %v863, %v54
    %vm867 = vcmp.eq.s32.totalorder %v863, %v55
    %vm868 = vcmp.eq.s32.totalorder %v863, %v56
    %vm869 = vcmp.eq.s32.totalorder %v863, %v57
    %vm870 = vcmp.eq.s32.totalorder %v863, %v58
    %vm871 = vcmp.eq.s32.totalorder %v863, %v59
    %v872 = vsel %vm864, 1, 0
    %v873 = vsel %vm865, 1, 0
    %v874 = vsel %vm866, 1, 0
    %v875 = vsel %vm867, 1, 0
    %v876 = vsel %vm868, 1, 0
    %v877 = vsel %vm869, 1, 0
    %v878 = vsel %vm870, 1, 0
    %v879 = vsel %vm871, 1, 0
    %v880 = vadd.s32 %v852, %v872
    %v881 = vadd.s32 %v853, %v873
    %v882 = vadd.s32 %v854, %v874
    %v883 = vadd.s32 %v855, %v875
    %v884 = vadd.s32 %v856, %v876
    %v885 = vadd.s32 %v857, %v877
    %v886 = vadd.s32 %v858, %v878
    %v887 = vadd.s32 %v859, %v879
    %v888 = vlaneseq
    %v889 = vshrl.u32 %v888, 7
    %v890 = vsub.s32 6, %v889
    %v891 = vrot.slane %v503, %v890
    %vm892 = vcmp.eq.s32.totalorder %v891, %v52
    %vm893 = vcmp.eq.s32.totalorder %v891, %v53
    %vm894 = vcmp.eq.s32.totalorder %v891, %v54
    %vm895 = vcmp.eq.s32.totalorder %v891, %v55
    %vm896 = vcmp.eq.s32.totalorder %v891, %v56
    %vm897 = vcmp.eq.s32.totalorder %v891, %v57
    %vm898 = vcmp.eq.s32.totalorder %v891, %v58
    %vm899 = vcmp.eq.s32.totalorder %v891, %v59
    %v900 = vsel %vm892, 1, 0
    %v901 = vsel %vm893, 1, 0
    %v902 = vsel %vm894, 1, 0
    %v903 = vsel %vm895, 1, 0
    %v904 = vsel %vm896, 1, 0
    %v905 = vsel %vm897, 1, 0
    %v906 = vsel %vm898, 1, 0
    %v907 = vsel %vm899, 1, 0
    %v908 = vadd.s32 %v880, %v900
    %v909 = vadd.s32 %v881, %v901
    %v910 = vadd.s32 %v882, %v902
    %v911 = vadd.s32 %v883, %v903
    %v912 = vadd.s32 %v884, %v904
    %v913 = vadd.s32 %v885, %v905
    %v914 = vadd.s32 %v886, %v906
    %v915 = vadd.s32 %v887, %v907
    %v916 = vlaneseq
    %v917 = vshrl.u32 %v916, 7
    %v918 = vsub.s32 7, %v917
    %v919 = vrot.slane %v503, %v918
    %vm920 = vcmp.eq.s32.totalorder %v919, %v52
    %vm921 = vcmp.eq.s32.totalorder %v919, %v53
    %vm922 = vcmp.eq.s32.totalorder %v919, %v54
    %vm923 = vcmp.eq.s32.totalorder %v919, %v55
    %vm924 = vcmp.eq.s32.totalorder %v919, %v56
    %vm925 = vcmp.eq.s32.totalorder %v919, %v57
    %vm926 = vcmp.eq.s32.totalorder %v919, %v58
    %vm927 = vcmp.eq.s32.totalorder %v919, %v59
    %v928 = vsel %vm920, 1, 0
    %v929 = vsel %vm921, 1, 0
    %v930 = vsel %vm922, 1, 0
    %v931 = vsel %vm923, 1, 0
    %v932 = vsel %vm924, 1, 0
    %v933 = vsel %vm925, 1, 0
    %v934 = vsel %vm926, 1, 0
    %v935 = vsel %vm927, 1, 0
    %v936 = vadd.s32 %v908, %v928
    %v937 = vadd.s32 %v909, %v929
    %v938 = vadd.s32 %v910, %v930
    %v939 = vadd.s32 %v911, %v931
    %v940 = vadd.s32 %v912, %v932
    %v941 = vadd.s32 %v913, %v933
    %v942 = vadd.s32 %v914, %v934
    %v943 = vadd.s32 %v915, %v935
    %v944 = vcvt.s32.f32 %v494
    %v945 = vcvt.s32.f32 %v495
    %v946 = vcvt.s32.f32 %v496
    %v947 = vcvt.s32.f32 %v497
    %v948 = vcvt.s32.f32 %v498
    %v949 = vcvt.s32.f32 %v499
    %v950 = vcvt.s32.f32 %v500
    %v951 = vcvt.s32.f32 %v501
    %v952 = vcvt.s32.f32 %v936
    %v953 = vcvt.s32.f32 %v937
    %v954 = vcvt.s32.f32 %v938
    %v955 = vcvt.s32.f32 %v939
    %v956 = vcvt.s32.f32 %v940
    %v957 = vcvt.s32.f32 %v941
    %v958 = vcvt.s32.f32 %v942
    %v959 = vcvt.s32.f32 %v943
    %v960 = vpack.c.bf16 %v945, %v944
    %v961 = vpack.c.bf16 %v947, %v946
    %v962 = vpack.c.bf16 %v949, %v948
    %v963 = vpack.c.bf16 %v951, %v950
    %v964 = vpack.c.bf16 %v953, %v952
    %v965 = vpack.c.bf16 %v955, %v954
    %v966 = vpack.c.bf16 %v957, %v956
    %v967 = vpack.c.bf16 %v959, %v958
    %v968 = vld [vmem:[#allocation2] sm:$0xff]
    %v969 = vld [vmem:[#allocation2 + $0x8] sm:$0xff]
    %v970 = vld [vmem:[#allocation2 + $0x10] sm:$0xff]
    %v971 = vld [vmem:[#allocation2 + $0x18] sm:$0xff]
    %v972 = vld [vmem:[#allocation3] sm:$0xf]
    %v973 = vld [vmem:[#allocation3 + $0x4] sm:$0xf]
    %v974 = vld [vmem:[#allocation3 + $0x8] sm:$0xf]
    %v975 = vld [vmem:[#allocation3 + $0xc] sm:$0xf]
    %v980 = vunpack.c.l.b16 %v972
    %v981 = vunpack.c.l.b16 %v973
    %v982 = vunpack.c.l.b16 %v974
    %v983 = vunpack.c.l.b16 %v975
    %v984 = vpack.c.b16 %v981, %v980
    %v985 = vpack.c.b16 %v983, %v982
    %988 = vmatprep.subr.bf16.mxu0 0
    %989 = vmatpush1.bf16.msra.mxu0 %v960
    %990 = vmatprep.subr.bf16.mxu0 0
    %991 = vmatpush1.bf16.msra.mxu0 %v961
    %992 = vmatprep.subr.bf16.mxu0 0
    %993 = vmatpush1.bf16.msra.mxu0 %v962
    %994 = vmatprep.subr.bf16.mxu0 0
    %995 = vmatpush1.bf16.msra.mxu0 %v963
    %996 = vmatprep.subr.bf16.mxu0 0
    %997 = vmatpush1.bf16.msra.mxu0 %v964
    %998 = vmatprep.subr.bf16.mxu0 0
    %999 = vmatpush1.bf16.msra.mxu0 %v965
    %1000 = vmatprep.subr.bf16.mxu0 0
    %1001 = vmatpush1.bf16.msra.mxu0 %v966
    %1002 = vmatprep.subr.bf16.mxu0 0
    %1003 = vmatpush1.bf16.msra.mxu0 %v967
    %1004 = vmatprep.subr.bf16.mxu0 0
    %1005 = vmatpush1.bf16.msra.mxu0 0
    %1006 = vmatprep.subr.bf16.mxu0 0
    %1007 = vmatpush1.bf16.msra.mxu0 0
    %1008 = vmatprep.subr.bf16.mxu0 0
    %1009 = vmatpush1.bf16.msra.mxu0 0
    %1010 = vmatprep.subr.bf16.mxu0 0
    %1011 = vmatpush1.bf16.msra.mxu0 0
    %1012 = vmatprep.subr.bf16.mxu0 0
    %1013 = vmatpush1.bf16.msra.mxu0 0
    %1014 = vmatprep.subr.bf16.mxu0 0
    %1015 = vmatpush1.bf16.msra.mxu0 0
    %1016 = vmatprep.subr.bf16.mxu0 0
    %1017 = vmatpush1.bf16.msra.mxu0 0
    %1018 = vmatprep.subr.bf16.mxu0 0
    %1019 = vmatpush1.bf16.msra.mxu0 0
    %1020 = vmatprep.mubr.bf16.mxu0 0
    %1021 = vmatmul.mubr.bf16.gmra.mrb[0].mxu0 %v984
    %v1022 = vpop.f32.mrb[0].mxu0
    %v1023 = vadd.f32 0.0, %v1022
    %v1024 = vpop.f32.mrb[0].mxu0
    %v1025 = vpop.f32.mrb[0].mxu0
    %v1026 = vadd.f32 0.0, %v1025
    %v1027 = vpop.f32.mrb[0].mxu0
    %1028 = vmatprep.mubr.bf16.mxu0 0
    %1029 = vmatmul.mubr.bf16.gmra.mrb[0].mxu0 %v985
    %v1030 = vpop.f32.mrb[0].mxu0
    %v1031 = vadd.f32 0.0, %v1030
    %v1032 = vpop.f32.mrb[0].mxu0
    %v1033 = vpop.f32.mrb[0].mxu0
    %v1034 = vadd.f32 0.0, %v1033
    %v1035 = vpop.f32.mrb[0].mxu0
    %1036 = vdwg.mxu0
    %v1037 = vadd.f32 %v968, %v1023
    %v1038 = vadd.f32 %v969, %v1026
    %v1039 = vadd.f32 %v970, %v1031
    %v1040 = vadd.f32 %v971, %v1034
    %1041 = vst [vmem:[#allocation2] sm:$0xff] %v1037
    %1042 = vst [vmem:[#allocation2 + $0x8] sm:$0xff] %v1038
    %1043 = vst [vmem:[#allocation2 + $0x10] sm:$0xff] %v1039
    %1044 = vst [vmem:[#allocation2 + $0x18] sm:$0xff] %v1040
    // Predicated region
    $region26: #{tpu_custom_call.1} parent=1 // pred_check
      %p1045 = pneg %p33
    $region27: #{tpu_custom_call.1} parent=1 // pred_check_branch
      %1047 = sbr.rel (%p1045) target = $region29
    $region28: #{tpu_custom_call.1} parent=1 // pred_region
      %v1048 = vld [vmem:[#allocation2] sm:$0xff]
      %v1049 = vld [vmem:[#allocation2 + $0x8] sm:$0xff]
      %v1050 = vld [vmem:[#allocation2 + $0x10] sm:$0xff]
      %v1051 = vld [vmem:[#allocation2 + $0x18] sm:$0xff]
      %v1052 = vld [vmem:[%s3] sm:$0xff]
      %v1053 = vld [vmem:[%s3 + $0x8] sm:$0xff]
      %v1054 = vld [vmem:[%s3 + $0x10] sm:$0xff]
      %v1055 = vld [vmem:[%s3 + $0x18] sm:$0xff]
      %1057 = vset.pattern.permute.xlu0 0
      %1058 = vperm.xlu0 %1057, %v1052
      %v1059 = vpop.permute.xlu0 %1058
      %1062 = vset.pattern.permute.xlu0 0
      %1063 = vperm.xlu0 %1062, %v1053
      %v1064 = vpop.permute.xlu0 %1063
      %1067 = vset.pattern.permute.xlu0 0
      %1068 = vperm.xlu0 %1067, %v1054
      %v1069 = vpop.permute.xlu0 %1068
      %1072 = vset.pattern.permute.xlu0 0
      %1073 = vperm.xlu0 %1072, %v1055
      %v1074 = vpop.permute.xlu0 %1073
      %v1076 = vadd.f32 %v1048, %v1059
      %v1077 = vadd.f32 %v1049, %v1064
      %v1078 = vadd.f32 %v1050, %v1069
      %v1079 = vadd.f32 %v1051, %v1074
      %v1080 = vtanh.pop %v1076
      %v1081 = vtanh.pop %v1077
      %v1082 = vtanh.pop %v1078
      %v1083 = vtanh.pop %v1079
      %1084 = vst [vmem:[#allocation6] sm:$0xff] %v1080
      %1085 = vst [vmem:[#allocation6 + $0x8] sm:$0xff] %v1081
      %1086 = vst [vmem:[#allocation6 + $0x10] sm:$0xff] %v1082
      %1087 = vst [vmem:[#allocation6 + $0x18] sm:$0xff] %v1083
    $region29: #{tpu_custom_call.1} parent=1 // pred_fallthru
      _
    // Predicated region
    $region30: #{tpu_custom_call.1} parent=1 // pred_check
      _
    $region31: #{tpu_custom_call.1} parent=1 // pred_check_branch
      %1089 = sbr.rel (0) target = $region33
    $region32: #{tpu_custom_call.1} parent=1 // pred_region
      %s1091 = ssub.s32 512, 512
      %1092 = vsyncadd [#allocation5], %s1091
      %s1093 = sshll.u32 [#allocation6], 4
      %s1094 = int_to_ptr.vmem [resolvable:$true] %s1093
      %1099 = dma.vmem_to_hbm [thread:$0]  %s1094, 512, %s4, [#allocation5], 128, 128, 8
    $region33: #{tpu_custom_call.1} parent=1 // pred_fallthru
      _
    // Predicated region
    $region34: #{tpu_custom_call.1} parent=1 // pred_check
      _
    $region35: #{tpu_custom_call.1} parent=1 // pred_check_branch
      %1101 = sbr.rel (0) target = $region37
    $region36: #{tpu_custom_call.1} parent=1 // pred_region
      %1102 = dma.done [#allocation5], 512
    $region37: #{tpu_custom_call.1} parent=1 // pred_fallthru
      _
    %1103 = vsyncpa [#allocation4], 1
    %1104 = vsyncpa [#allocation5], 1

</llo_original>
